<compile_context>
chip_gen: v6e
topology: v6e:2x2x1
jax: 0.10.0
libtpu: 0.0.40
codegen_flags: <defaults>
</compile_context>

<pallas_src>
import functools

import jax
import jax.numpy as jnp
from jax import lax
from jax.experimental import pallas as pl
from jax.experimental.pallas import tpu as pltpu


# ----------------------------- config ---------------------------------------
class Config:
    n_embed = 32
    num_heads = 4
    head_size = 8          # num_heads * head_size == n_embed
    context_len = 8
    attn_dropout_val = 0.0
    mha_dropout_val = 0.0


NEG_INF = -1e30            # large finite negative additive mask (avoids -inf NaNs)


# ----------------------------- kernel ----------------------------------------
def mha_kernel(x_ref, wqkv_ref, wp_ref, bp_ref, o_ref, *,
               num_heads, head_size, lane_dense_out):
    Bt, T, E = x_ref.shape
    H = num_heads * head_size

    x = x_ref[...]                                    # (Bt, T, E) f32
    x2d = x.reshape(Bt * T, E)                        # leading-dim collapse (free)

    # ---- fused QKV projection: one wide MXU matmul (bf16 in, f32 accumulate) ----
    qkv = jnp.dot(x2d.astype(jnp.bfloat16), wqkv_ref[...],
                  preferred_element_type=jnp.float32)          # (Bt*T, 3*H)
    qkv = qkv.reshape(Bt, T, 3 * H)

    # Split the lane dim into 3*nh head chunks and batch them on a leading axis
    # (layout-only ops: static lane slices + one leading-dim stack).
    chunks = [qkv[:, :, i * head_size:(i + 1) * head_size]
              for i in range(3 * num_heads)]                   # each (Bt, T, hs)
    allheads = jnp.stack(chunks, axis=0)                       # (3*nh, Bt, T, hs)
    q = allheads[0 * num_heads:1 * num_heads].reshape(num_heads * Bt, T, head_size)
    k = allheads[1 * num_heads:2 * num_heads].reshape(num_heads * Bt, T, head_size)
    v = allheads[2 * num_heads:3 * num_heads].reshape(num_heads * Bt, T, head_size)

    # ---- causal attention, batched over (head, batch) with one softmax ----
    rows = lax.broadcasted_iota(jnp.int32, (T, T), 0)
    cols = lax.broadcasted_iota(jnp.int32, (T, T), 1)
    addmask = jnp.where(rows >= cols, 0.0, NEG_INF).astype(jnp.float32)  # built once

    s = jnp.einsum('btd,bsd->bts',
                   q.astype(jnp.bfloat16), k.astype(jnp.bfloat16),
                   preferred_element_type=jnp.float32)          # (nh*Bt, T, T)
    # NOTE: reference divides by head_size (not sqrt(head_size)).
    s = s * (1.0 / float(head_size)) + addmask[None, :, :]

    m = jnp.max(s, axis=-1, keepdims=True)
    p = jnp.exp(s - m)
    denom = jnp.sum(p, axis=-1, keepdims=True)
    p = p * pl.reciprocal(denom, approx=True)                   # softmax (EUP recip)
    # TODO(synk): attn_drop / mha_drop implemented as identity (eval mode, p=0.0).

    o = jnp.einsum('bts,bsd->btd',
                   p.astype(jnp.bfloat16), v.astype(jnp.bfloat16),
                   preferred_element_type=jnp.float32)          # (nh*Bt, T, hs)

    # ---- merge heads (single lane concat) + output projection ----
    o4 = o.reshape(num_heads, Bt, T, head_size)                 # leading split (free)
    cat = jnp.concatenate([o4[h] for h in range(num_heads)], axis=-1)   # (Bt, T, H)
    cat2 = cat.reshape(Bt * T, H)
    proj = jnp.dot(cat2.astype(jnp.bfloat16), wp_ref[...],
                   preferred_element_type=jnp.float32) + bp_ref[...]    # (Bt*T, E)

    if lane_dense_out:
        o_ref[...] = proj.reshape(Bt, T * E)    # lane-dense store (256 = 2*128 lanes)
    else:
        o_ref[...] = proj.reshape(Bt, T, E)


# ----------------------------- wrapper ----------------------------------------
def pack_params(params):
    """Host-side packing: fuse per-head Q/K/V weights, cast matmul weights to bf16."""
    nh, E, hs = params["wq"].shape
    to2d = lambda w: jnp.transpose(w, (1, 0, 2)).reshape(E, nh * hs)  # cols = (head, dim)
    wqkv = jnp.concatenate([to2d(params["wq"]),
                            to2d(params["wk"]),
                            to2d(params["wv"])], axis=1)              # (E, 3*nh*hs)
    return {
        "wqkv": wqkv.astype(jnp.bfloat16),
        "wp": params["wp"].astype(jnp.bfloat16),
        "bp": params["bp"].astype(jnp.float32),
    }


def _build_call(B, T, E, nh, hs, num_blocks, lane_dense_out):
    Bt = B // num_blocks
    H = nh * hs
    kernel = functools.partial(mha_kernel, num_heads=nh, head_size=hs,
                               lane_dense_out=lane_dense_out)

    if lane_dense_out:
        out_shape = jax.ShapeDtypeStruct((B, T * E), jnp.float32)
        out_spec = pl.BlockSpec((Bt, T * E), lambda g: (g, 0))
    else:
        out_shape = jax.ShapeDtypeStruct((B, T, E), jnp.float32)
        out_spec = pl.BlockSpec((Bt, T, E), lambda g: (g, 0, 0))

    return pl.pallas_call(
        kernel,
        out_shape=out_shape,
        grid_spec=pltpu.PrefetchScalarGridSpec(
            num_scalar_prefetch=0,
            grid=(num_blocks,),
            in_specs=[
                pl.BlockSpec((Bt, T, E), lambda g: (g, 0, 0)),     # x (f32)
                pl.BlockSpec((E, 3 * H), lambda g: (0, 0)),        # Wqkv (bf16)
                pl.BlockSpec((H, E), lambda g: (0, 0)),            # Wproj (bf16)
                pl.BlockSpec((1, E), lambda g: (0, 0)),            # bproj (f32)
            ],
            out_specs=out_spec,
        ),
        compiler_params=pltpu.CompilerParams(
            dimension_semantics=("parallel",)),                    # both TCs on v7x
    )


def mha_forward(x, params, cfg, *, num_blocks=None, lane_dense_out=True):
    B, T, E = x.shape
    nh, hs = cfg.num_heads, cfg.head_size
    if num_blocks is None:
        num_blocks = 2 if (B % 2 == 0 and B >= 2) else 1
    assert B % num_blocks == 0

    packed = pack_params(params)
    call = _build_call(B, T, E, nh, hs, num_blocks, lane_dense_out)
    out = call(x.astype(jnp.float32), packed["wqkv"], packed["wp"], packed["bp"])
    if lane_dense_out:
        out = out.reshape(B, T, E)
    return out


# ----------------------------- pure-JAX reference ------------------------------
def mha_reference(x, p, cfg):
    nh, hs = cfg.num_heads, cfg.head_size
    B, T, E = x.shape
    mask = jnp.tril(jnp.ones((T, T), bool))
    outs = []
    for h in range(nh):
        q = x @ p["wq"][h]
        k = x @ p["wk"][h]
        v = x @ p["wv"][h]
        s = jnp.einsum("btd,bsd->bts", q, k) / float(hs)
        s = jnp.where(mask, s, -jnp.inf)
        a = jax.nn.softmax(s, axis=-1)
        outs.append(jnp.einsum("bts,bsd->btd", a, v))
    return jnp.concatenate(outs, -1) @ p["wp"] + p["bp"]


# ----------------------------- main ------------------------------------------
if __name__ == "__main__":
    cfg = Config()
    B, T, E = 8, cfg.context_len, cfg.n_embed
    nh, hs = cfg.num_heads, cfg.head_size

    key = jax.random.PRNGKey(0)
    keys = jax.random.split(key, 8)

    def init(k, shape, scale=0.05):
        return (scale * jax.random.normal(k, shape)).astype(jnp.float32)

    params = {
        "wq": init(keys[0], (nh, E, hs)),
        "wk": init(keys[1], (nh, E, hs)),
        "wv": init(keys[2], (nh, E, hs)),
        "wp": init(keys[3], (nh * hs, E)),
        "bp": init(keys[4], (1, E)),
    }
    x = init(keys[5], (B, T, E), scale=1.0)

    try:
        out = jax.block_until_ready(mha_forward(x, params, cfg, lane_dense_out=True))
    except Exception:
        # Fallback if the installed Mosaic rejects the (Bt*T,E)->(Bt,T*E) relayout.
        out = jax.block_until_ready(mha_forward(x, params, cfg, lane_dense_out=False))

    ref = mha_reference(x, params, cfg)
    assert out.shape == (B, T, E)
    max_err = float(jnp.max(jnp.abs(out - ref)))
    assert jnp.allclose(out, ref, atol=2e-2, rtol=2e-2), f"mismatch vs reference: {max_err}"

    print("KERNEL_OK")
</pallas_src>

<mosaic_0001>
module attributes {stable_mosaic.version = 11 : i64} {
  func.func @mha_kernel(%arg0: i32, %arg1: memref<4x8x32xf32, #tpu.memory_space<vmem>>, %arg2: memref<32x96xbf16, #tpu.memory_space<vmem>>, %arg3: memref<32x32xbf16, #tpu.memory_space<vmem>>, %arg4: memref<1x32xf32, #tpu.memory_space<vmem>>, %arg5: memref<4x8x32xf32, #tpu.memory_space<vmem>>) attributes {dimension_semantics = [#tpu.dimension_semantics<parallel>], iteration_bounds = array<i64: 2>, scalar_prefetch = 0 : i64, scratch_operands = 0 : i64, tpu.core_type = #tpu.core_type<tc>, window_params = [{transform_indices = @transform_0, window_bounds = array<i64: 4, 8, 32>}, {pipeline_mode = #tpu.pipeline_mode<synchronous>, transform_indices = @transform_1, window_bounds = array<i64: 32, 96>}, {pipeline_mode = #tpu.pipeline_mode<synchronous>, transform_indices = @transform_2, window_bounds = array<i64: 32, 32>}, {pipeline_mode = #tpu.pipeline_mode<synchronous>, transform_indices = @transform_3, window_bounds = array<i64: 1, 32>}, {transform_indices = @transform_4, window_bounds = array<i64: 4, 8, 32>}]} {
    %c0 = arith.constant 0 : index
    %c0_0 = arith.constant 0 : index
    %c0_1 = arith.constant 0 : index
    %0 = vector.load %arg1[%c0, %c0_0, %c0_1] : memref<4x8x32xf32, #tpu.memory_space<vmem>>, vector<4x8x32xf32>
    %1 = vector.shape_cast %0 : vector<4x8x32xf32> to vector<32x32xf32>
    %2 = arith.truncf %1 : vector<32x32xf32> to vector<32x32xbf16>
    %c0_2 = arith.constant 0 : index
    %c0_3 = arith.constant 0 : index
    %3 = vector.load %arg2[%c0_2, %c0_3] : memref<32x96xbf16, #tpu.memory_space<vmem>>, vector<32x96xbf16>
    %cst = arith.constant dense<0.000000e+00> : vector<32x96xf32>
    %4 = tpu.matmul %2, %3, %cst {dimension_numbers = #tpu.dot_dimension_numbers<[1], [0], [0], [1], [0, 0, 1, 1], [], []>} : vector<32x32xbf16>, vector<32x96xbf16>, vector<32x96xf32> -> vector<32x96xf32>
    %5 = vector.shape_cast %4 : vector<32x96xf32> to vector<4x8x96xf32>
    %6 = vector.extract_strided_slice %5 {offsets = [0, 0, 0], sizes = [4, 8, 8], strides = [1, 1, 1]} : vector<4x8x96xf32> to vector<4x8x8xf32>
    %7 = vector.extract_strided_slice %5 {offsets = [0, 0, 8], sizes = [4, 8, 8], strides = [1, 1, 1]} : vector<4x8x96xf32> to vector<4x8x8xf32>
    %8 = vector.extract_strided_slice %5 {offsets = [0, 0, 16], sizes = [4, 8, 8], strides = [1, 1, 1]} : vector<4x8x96xf32> to vector<4x8x8xf32>
    %9 = vector.extract_strided_slice %5 {offsets = [0, 0, 24], sizes = [4, 8, 8], strides = [1, 1, 1]} : vector<4x8x96xf32> to vector<4x8x8xf32>
    %10 = vector.extract_strided_slice %5 {offsets = [0, 0, 32], sizes = [4, 8, 8], strides = [1, 1, 1]} : vector<4x8x96xf32> to vector<4x8x8xf32>
    %11 = vector.extract_strided_slice %5 {offsets = [0, 0, 40], sizes = [4, 8, 8], strides = [1, 1, 1]} : vector<4x8x96xf32> to vector<4x8x8xf32>
    %12 = vector.extract_strided_slice %5 {offsets = [0, 0, 48], sizes = [4, 8, 8], strides = [1, 1, 1]} : vector<4x8x96xf32> to vector<4x8x8xf32>
    %13 = vector.extract_strided_slice %5 {offsets = [0, 0, 56], sizes = [4, 8, 8], strides = [1, 1, 1]} : vector<4x8x96xf32> to vector<4x8x8xf32>
    %14 = vector.extract_strided_slice %5 {offsets = [0, 0, 64], sizes = [4, 8, 8], strides = [1, 1, 1]} : vector<4x8x96xf32> to vector<4x8x8xf32>
    %15 = vector.extract_strided_slice %5 {offsets = [0, 0, 72], sizes = [4, 8, 8], strides = [1, 1, 1]} : vector<4x8x96xf32> to vector<4x8x8xf32>
    %16 = vector.extract_strided_slice %5 {offsets = [0, 0, 80], sizes = [4, 8, 8], strides = [1, 1, 1]} : vector<4x8x96xf32> to vector<4x8x8xf32>
    %17 = vector.extract_strided_slice %5 {offsets = [0, 0, 88], sizes = [4, 8, 8], strides = [1, 1, 1]} : vector<4x8x96xf32> to vector<4x8x8xf32>
    %18 = vector.shape_cast %6 : vector<4x8x8xf32> to vector<1x4x8x8xf32>
    %19 = vector.shape_cast %7 : vector<4x8x8xf32> to vector<1x4x8x8xf32>
    %20 = vector.shape_cast %8 : vector<4x8x8xf32> to vector<1x4x8x8xf32>
    %21 = vector.shape_cast %9 : vector<4x8x8xf32> to vector<1x4x8x8xf32>
    %22 = vector.shape_cast %10 : vector<4x8x8xf32> to vector<1x4x8x8xf32>
    %23 = vector.shape_cast %11 : vector<4x8x8xf32> to vector<1x4x8x8xf32>
    %24 = vector.shape_cast %12 : vector<4x8x8xf32> to vector<1x4x8x8xf32>
    %25 = vector.shape_cast %13 : vector<4x8x8xf32> to vector<1x4x8x8xf32>
    %26 = vector.shape_cast %14 : vector<4x8x8xf32> to vector<1x4x8x8xf32>
    %27 = vector.shape_cast %15 : vector<4x8x8xf32> to vector<1x4x8x8xf32>
    %28 = vector.shape_cast %16 : vector<4x8x8xf32> to vector<1x4x8x8xf32>
    %29 = vector.shape_cast %17 : vector<4x8x8xf32> to vector<1x4x8x8xf32>
    %30 = tpu.concatenate %18, %19, %20, %21, %22, %23, %24, %25, %26, %27, %28, %29 in 0 : vector<1x4x8x8xf32>, vector<1x4x8x8xf32>, vector<1x4x8x8xf32>, vector<1x4x8x8xf32>, vector<1x4x8x8xf32>, vector<1x4x8x8xf32>, vector<1x4x8x8xf32>, vector<1x4x8x8xf32>, vector<1x4x8x8xf32>, vector<1x4x8x8xf32>, vector<1x4x8x8xf32>, vector<1x4x8x8xf32> -> vector<12x4x8x8xf32>
    %31 = vector.extract_strided_slice %30 {offsets = [0, 0, 0, 0], sizes = [4, 4, 8, 8], strides = [1, 1, 1, 1]} : vector<12x4x8x8xf32> to vector<4x4x8x8xf32>
    %32 = vector.shape_cast %31 : vector<4x4x8x8xf32> to vector<16x8x8xf32>
    %33 = vector.extract_strided_slice %30 {offsets = [4, 0, 0, 0], sizes = [4, 4, 8, 8], strides = [1, 1, 1, 1]} : vector<12x4x8x8xf32> to vector<4x4x8x8xf32>
    %34 = vector.shape_cast %33 : vector<4x4x8x8xf32> to vector<16x8x8xf32>
    %35 = vector.extract_strided_slice %30 {offsets = [8, 0, 0, 0], sizes = [4, 4, 8, 8], strides = [1, 1, 1, 1]} : vector<12x4x8x8xf32> to vector<4x4x8x8xf32>
    %36 = vector.shape_cast %35 : vector<4x4x8x8xf32> to vector<16x8x8xf32>
    %37 = tpu.iota {dimensions = array<i32: 0>} : vector<8x8xi32>
    %38 = tpu.iota {dimensions = array<i32: 1>} : vector<8x8xi32>
    %39 = arith.cmpi sge, %37, %38 : vector<8x8xi32>
    %cst_4 = arith.constant 0.000000e+00 : f32
    %cst_5 = arith.constant -1.000000e+30 : f32
    %40 = vector.broadcast %cst_4 : f32 to vector<8x8xf32>
    %41 = vector.broadcast %cst_5 : f32 to vector<8x8xf32>
    %42 = arith.select %39, %40, %41 : vector<8x8xi1>, vector<8x8xf32>
    %43 = arith.truncf %32 : vector<16x8x8xf32> to vector<16x8x8xbf16>
    %44 = arith.truncf %34 : vector<16x8x8xf32> to vector<16x8x8xbf16>
    "tpu.trace_start"() <{level = 10 : i32, message = "btd,bsd->bts"}> : () -> ()
    %cst_6 = arith.constant dense<0.000000e+00> : vector<16x8x8xf32>
    %45 = tpu.matmul %43, %44, %cst_6 {dimension_numbers = #tpu.dot_dimension_numbers<[2], [2], [1], [1], [0, 0, 0, 1, 1, 1], [0], [0]>} : vector<16x8x8xbf16>, vector<16x8x8xbf16>, vector<16x8x8xf32> -> vector<16x8x8xf32>
    "tpu.trace_stop"() : () -> ()
    %cst_7 = arith.constant 1.250000e-01 : f32
    %46 = vector.broadcast %cst_7 : f32 to vector<16x8x8xf32>
    %47 = arith.mulf %45, %46 : vector<16x8x8xf32>
    %48 = vector.shape_cast %42 : vector<8x8xf32> to vector<1x8x8xf32>
    %49 = vector.broadcast %48 : vector<1x8x8xf32> to vector<16x8x8xf32>
    %50 = arith.addf %47, %49 : vector<16x8x8xf32>
    %cst_8 = arith.constant dense<0xFF800000> : vector<16x8xf32>
    %51 = vector.multi_reduction <maximumf>, %50, %cst_8 [2] : vector<16x8x8xf32> to vector<16x8xf32>
    %52 = vector.shape_cast %51 : vector<16x8xf32> to vector<16x8x1xf32>
    %53 = vector.broadcast %52 : vector<16x8x1xf32> to vector<16x8x8xf32>
    %54 = arith.subf %50, %53 : vector<16x8x8xf32>
    %55 = math.exp %54 : vector<16x8x8xf32>
    %cst_9 = arith.constant dense<0.000000e+00> : vector<16x8xf32>
    %56 = vector.multi_reduction <add>, %55, %cst_9 [2] : vector<16x8x8xf32> to vector<16x8xf32>
    %57 = vector.shape_cast %56 : vector<16x8xf32> to vector<16x8x1xf32>
    %58 = tpu.reciprocal %57 {approx = true} : vector<16x8x1xf32> -> vector<16x8x1xf32>
    %59 = vector.broadcast %58 : vector<16x8x1xf32> to vector<16x8x8xf32>
    %60 = arith.mulf %55, %59 : vector<16x8x8xf32>
    %61 = arith.truncf %60 : vector<16x8x8xf32> to vector<16x8x8xbf16>
    %62 = arith.truncf %36 : vector<16x8x8xf32> to vector<16x8x8xbf16>
    "tpu.trace_start"() <{level = 10 : i32, message = "bts,bsd->btd"}> : () -> ()
    %cst_10 = arith.constant dense<0.000000e+00> : vector<16x8x8xf32>
    %63 = tpu.matmul %61, %62, %cst_10 {dimension_numbers = #tpu.dot_dimension_numbers<[2], [1], [1], [2], [0, 0, 0, 1, 1, 2], [0], [0]>} : vector<16x8x8xbf16>, vector<16x8x8xbf16>, vector<16x8x8xf32> -> vector<16x8x8xf32>
    "tpu.trace_stop"() : () -> ()
    %64 = vector.shape_cast %63 : vector<16x8x8xf32> to vector<4x4x8x8xf32>
    %65 = vector.extract_strided_slice %64 {offsets = [0, 0, 0, 0], sizes = [1, 4, 8, 8], strides = [1, 1, 1, 1]} : vector<4x4x8x8xf32> to vector<1x4x8x8xf32>
    %66 = vector.shape_cast %65 : vector<1x4x8x8xf32> to vector<4x8x8xf32>
    %67 = vector.extract_strided_slice %64 {offsets = [1, 0, 0, 0], sizes = [1, 4, 8, 8], strides = [1, 1, 1, 1]} : vector<4x4x8x8xf32> to vector<1x4x8x8xf32>
    %68 = vector.shape_cast %67 : vector<1x4x8x8xf32> to vector<4x8x8xf32>
    %69 = vector.extract_strided_slice %64 {offsets = [2, 0, 0, 0], sizes = [1, 4, 8, 8], strides = [1, 1, 1, 1]} : vector<4x4x8x8xf32> to vector<1x4x8x8xf32>
    %70 = vector.shape_cast %69 : vector<1x4x8x8xf32> to vector<4x8x8xf32>
    %71 = vector.extract_strided_slice %64 {offsets = [3, 0, 0, 0], sizes = [1, 4, 8, 8], strides = [1, 1, 1, 1]} : vector<4x4x8x8xf32> to vector<1x4x8x8xf32>
    %72 = vector.shape_cast %71 : vector<1x4x8x8xf32> to vector<4x8x8xf32>
    %73 = tpu.concatenate %66, %68, %70, %72 in 2 : vector<4x8x8xf32>, vector<4x8x8xf32>, vector<4x8x8xf32>, vector<4x8x8xf32> -> vector<4x8x32xf32>
    %74 = vector.shape_cast %73 : vector<4x8x32xf32> to vector<32x32xf32>
    %75 = arith.truncf %74 : vector<32x32xf32> to vector<32x32xbf16>
    %c0_11 = arith.constant 0 : index
    %c0_12 = arith.constant 0 : index
    %76 = vector.load %arg3[%c0_11, %c0_12] : memref<32x32xbf16, #tpu.memory_space<vmem>>, vector<32x32xbf16>
    %cst_13 = arith.constant dense<0.000000e+00> : vector<32x32xf32>
    %77 = tpu.matmul %75, %76, %cst_13 {dimension_numbers = #tpu.dot_dimension_numbers<[1], [0], [0], [1], [0, 0, 1, 1], [], []>} : vector<32x32xbf16>, vector<32x32xbf16>, vector<32x32xf32> -> vector<32x32xf32>
    %c0_14 = arith.constant 0 : index
    %c0_15 = arith.constant 0 : index
    %78 = vector.load %arg4[%c0_14, %c0_15] : memref<1x32xf32, #tpu.memory_space<vmem>>, vector<1x32xf32>
    %79 = vector.broadcast %78 : vector<1x32xf32> to vector<32x32xf32>
    %80 = arith.addf %77, %79 : vector<32x32xf32>
    %81 = vector.shape_cast %80 : vector<32x32xf32> to vector<4x8x32xf32>
    %c0_16 = arith.constant 0 : index
    %c0_17 = arith.constant 0 : index
    %c0_18 = arith.constant 0 : index
    %82 = vector.load %arg5[%c0_16, %c0_17, %c0_18] : memref<4x8x32xf32, #tpu.memory_space<vmem>>, vector<4x8x32xf32>
    tpu.vector_store %arg5[%c0_16, %c0_17, %c0_18], %81 {strides = array<i32>} : memref<4x8x32xf32, #tpu.memory_space<vmem>>, vector<4x8x32xf32>,
    return
  }
  func.func @transform_0(%arg0: i32) -> (i32, i32, i32) {
    %c0_i32 = arith.constant 0 : i32
    %c0_i32_0 = arith.constant 0 : i32
    %c0_i32_1 = arith.constant 0 : i32
    return %arg0, %c0_i32, %c0_i32_0 : i32, i32, i32
  }
  func.func @transform_1(%arg0: i32) -> (i32, i32) {
    %c0_i32 = arith.constant 0 : i32
    %c0_i32_0 = arith.constant 0 : i32
    %c0_i32_1 = arith.constant 0 : i32
    return %c0_i32, %c0_i32_0 : i32, i32
  }
  func.func @transform_2(%arg0: i32) -> (i32, i32) {
    %c0_i32 = arith.constant 0 : i32
    %c0_i32_0 = arith.constant 0 : i32
    %c0_i32_1 = arith.constant 0 : i32
    return %c0_i32, %c0_i32_0 : i32, i32
  }
  func.func @transform_3(%arg0: i32) -> (i32, i32) {
    %c0_i32 = arith.constant 0 : i32
    %c0_i32_0 = arith.constant 0 : i32
    %c0_i32_1 = arith.constant 0 : i32
    return %c0_i32, %c0_i32_0 : i32, i32
  }
  func.func @transform_4(%arg0: i32) -> (i32, i32, i32) {
    %c0_i32 = arith.constant 0 : i32
    %c0_i32_0 = arith.constant 0 : i32
    %c0_i32_1 = arith.constant 0 : i32
    return %arg0, %c0_i32, %c0_i32_0 : i32, i32, i32
  }
}

</mosaic_0001>

<llo_original>
// kernel: tpu_custom_call.1
$region0: #{tpu_custom_call.1}
  #allocation0 [shape = 'u32[]', space=smem, size = 0x4, offset = 0x4, fixed_abs, tag = 'smem constant byte address 0x4 - core index']
  #allocation1 [shape = 'u32[144,128]{1,0:T(1,128)}', space=vmem, size = 0x12000, scoped, tag = 'internal scratch']
  %s0 = inlined_call_operand.hbm [shape: f32[8,8,32], index: 0, kind: input, shape index: {}]
  %s1 = inlined_call_operand.hbm [shape: bf16[32,96], index: 1, kind: input, shape index: {}]
  %s2 = inlined_call_operand.hbm [shape: bf16[32,32], index: 2, kind: input, shape index: {}]
  %s3 = inlined_call_operand.vmem [shape: f32[1,32], index: 3, kind: input, shape index: {}]
  %s4 = inlined_call_operand.hbm [shape: f32[8,8,32], index: 4, kind: output, shape index: {}]
  %s5 = sld [smem:[#allocation0]]
  $region61: #{tpu_custom_call.1} parent=0
    _
  %s7 = ssub.s32 1, %s5
  %s8 = scalar_select 0, %s7, %s5
  $region1: #{tpu_custom_call.1} parent=0
    #allocation2 [shape = 'u8[32768]{0}', space=vmem, size = 0x8000, scoped, tag = 'input window, operand 0']
    #allocation3 [shape = 's32[2]{0}', space=sflag, size = 0x8, scoped, tag = 'scoped memory for tpu_custom_call.1']
    #allocation4 [shape = 's32[2]{0}', space=sflag, size = 0x8, scoped, tag = 'scoped memory for tpu_custom_call.1']
    #allocation5 [shape = 'u8[8192]{0}', space=vmem, size = 0x2000, scoped, tag = 'input window, operand 1, single buffered']
    #allocation6 [shape = 's32[1]{0}', space=sflag, size = 0x4, scoped, tag = 'scoped memory for tpu_custom_call.1']
    #allocation7 [shape = 'u8[8192]{0}', space=vmem, size = 0x2000, scoped, tag = 'input window, operand 2, single buffered']
    #allocation8 [shape = 'u8[32768]{0}', space=vmem, size = 0x8000, scoped, tag = 'output window, operand 0']
    %9 = vsyncpa [#allocation3], 0
    %s10 = scalar_lea.sflag [#allocation3], 1
    %11 = vsyncpa %s10, 0
    %12 = vsyncpa [#allocation6], 0
    %13 = vsyncpa [#allocation4], 0
    %s14 = scalar_lea.sflag [#allocation4], 1
    %15 = vsyncpa %s14, 0
    loop: start=0, step=1, limit=4
    $region2: #{tpu_custom_call.1} parent=1 // loop_pre_header
      _
    $region3: #{tpu_custom_call.1} parent=1 // loop_header
      %s17 = sphi 0, %s21
      %p18 = scmp.ge.s32.totalorder %s17, 4
      %s27 = sphi 0, %s29
      %s30 = sphi 0, %s27
      %s31 = sphi 0, %s30
      %s47 = sphi 0, %s31
      %s51 = sphi 0, %s51
      %s53 = sphi 0, %s51
      %s54 = sphi 0, %s53
      %s68 = sphi 0, %s54
      %s72 = sphi 0, %s72
      %s74 = sphi 0, %s72
      %s75 = sphi 0, %s74
      %s89 = sphi 0, %s75
      %s93 = sphi 0, %s93
      %s95 = sphi 0, %s93
      %s96 = sphi 0, %s95
      %s110 = sphi 0, %s96
      %s116 = sphi 0, %s118
      %s119 = sphi 0, %s116
      %s120 = sphi 0, %s119
      %s136 = sphi 0, %s120
    $region4: #{tpu_custom_call.1} parent=1 // loop_header_branch
      %20 = sbr.rel (%p18) target = $region8
    $region5: #{tpu_custom_call.1} parent=1 // loop_body
      %s22 = ssub.s32 %s17, 1
      %s23 = ssub.s32 %s17, 2
      %s24 = sadd.s32 %s17, 1
      %s25 = ssub.s32 %s17, %s24
      %p26 = scmp.eq.s32.totalorder %s25, 0
      %s28 = sadd.s32 %s27, 1
      %s29 = scalar_select %p26, %s27, %s28
      %p32 = pneg %p26
      %p33 = scmp.eq.s32.totalorder %s17, 1
      %p34 = por %p32, %p33
      %p35 = scmp.ne.s32.totalorder %s27, %s30
      %p36 = scmp.eq.s32.totalorder %s17, 0
      %p37 = por %p35, %p36
      %p38 = scmp.ne.s32.totalorder %s27, %s30
      %p39 = scmp.eq.s32.totalorder %s22, 1
      %p40 = por %p38, %p39
      %p41 = scmp.ne.s32.totalorder %s30, %s31
      %p42 = scmp.eq.s32.totalorder %s22, 0
      %p43 = por %p41, %p42
      %p44 = scmp.ne.s32.totalorder %s30, %s31
      %p45 = scmp.eq.s32.totalorder %s23, 1
      %p46 = por %p44, %p45
      %p48 = scmp.ne.s32.totalorder %s31, %s47
      %p49 = scmp.eq.s32.totalorder %s23, 0
      %p50 = por %p48, %p49
      %s52 = sadd.s32 %s51, 1
      %p55 = scmp.eq.s32.totalorder %s17, 1
      %p56 = scmp.ne.s32.totalorder %s51, %s53
      %p57 = scmp.eq.s32.totalorder %s17, 0
      %p58 = por %p56, %p57
      %p59 = scmp.ne.s32.totalorder %s51, %s53
      %p60 = scmp.eq.s32.totalorder %s22, 1
      %p61 = por %p59, %p60
      %p62 = scmp.ne.s32.totalorder %s53, %s54
      %p63 = scmp.eq.s32.totalorder %s22, 0
      %p64 = por %p62, %p63
      %p65 = scmp.ne.s32.totalorder %s53, %s54
      %p66 = scmp.eq.s32.totalorder %s23, 1
      %p67 = por %p65, %p66
      %p69 = scmp.ne.s32.totalorder %s54, %s68
      %p70 = scmp.eq.s32.totalorder %s23, 0
      %p71 = por %p69, %p70
      %s73 = sadd.s32 %s72, 1
      %p76 = scmp.eq.s32.totalorder %s17, 1
      %p77 = scmp.ne.s32.totalorder %s72, %s74
      %p78 = scmp.eq.s32.totalorder %s17, 0
      %p79 = por %p77, %p78
      %p80 = scmp.ne.s32.totalorder %s72, %s74
      %p81 = scmp.eq.s32.totalorder %s22, 1
      %p82 = por %p80, %p81
      %p83 = scmp.ne.s32.totalorder %s74, %s75
      %p84 = scmp.eq.s32.totalorder %s22, 0
      %p85 = por %p83, %p84
      %p86 = scmp.ne.s32.totalorder %s74, %s75
      %p87 = scmp.eq.s32.totalorder %s23, 1
      %p88 = por %p86, %p87
      %p90 = scmp.ne.s32.totalorder %s75, %s89
      %p91 = scmp.eq.s32.totalorder %s23, 0
      %p92 = por %p90, %p91
      %s94 = sadd.s32 %s93, 1
      %p97 = scmp.eq.s32.totalorder %s17, 1
      %p98 = scmp.ne.s32.totalorder %s93, %s95
      %p99 = scmp.eq.s32.totalorder %s17, 0
      %p100 = por %p98, %p99
      %p101 = scmp.ne.s32.totalorder %s93, %s95
      %p102 = scmp.eq.s32.totalorder %s22, 1
      %p103 = por %p101, %p102
      %p104 = scmp.ne.s32.totalorder %s95, %s96
      %p105 = scmp.eq.s32.totalorder %s22, 0
      %p106 = por %p104, %p105
      %p107 = scmp.ne.s32.totalorder %s95, %s96
      %p108 = scmp.eq.s32.totalorder %s23, 1
      %p109 = por %p107, %p108
      %p111 = scmp.ne.s32.totalorder %s96, %s110
      %p112 = scmp.eq.s32.totalorder %s23, 0
      %p113 = por %p111, %p112
      %s114 = ssub.s32 %s17, %s24
      %p115 = scmp.eq.s32.totalorder %s114, 0
      %s117 = sadd.s32 %s116, 1
      %s118 = scalar_select %p115, %s116, %s117
      %p121 = pneg %p115
      %p122 = scmp.eq.s32.totalorder %s17, 1
      %p123 = por %p121, %p122
      %p124 = scmp.ne.s32.totalorder %s116, %s119
      %p125 = scmp.eq.s32.totalorder %s17, 0
      %p126 = por %p124, %p125
      %p127 = scmp.ne.s32.totalorder %s116, %s119
      %p128 = scmp.eq.s32.totalorder %s22, 1
      %p129 = por %p127, %p128
      %p130 = scmp.ne.s32.totalorder %s119, %s120
      %p131 = scmp.eq.s32.totalorder %s22, 0
      %p132 = por %p130, %p131
      %p133 = scmp.ne.s32.totalorder %s119, %s120
      %p134 = scmp.eq.s32.totalorder %s23, 1
      %p135 = por %p133, %p134
      %p137 = scmp.ne.s32.totalorder %s120, %s136
      %p138 = scmp.eq.s32.totalorder %s23, 0
      %p139 = por %p137, %p138
      %p140 = scmp.le.s32.totalorder 1, %s17
      %p141 = scmp.lt.s32.totalorder %s17, 3
      %p142 = pnand %p140, %p141
      %p143 = pneg %p142
      // Predicated region
      $region9: #{tpu_custom_call.1} parent=5 // pred_check
        _
      $region10: #{tpu_custom_call.1} parent=5 // pred_check_branch
        %145 = sbr.rel (%p142) target = $region12
      $region11: #{tpu_custom_call.1} parent=5 // pred_region
        %s146 = ssub.s32 %s17, 1
        // Predicated region
        $region13: #{tpu_custom_call.1} parent=11 // pred_check
          %p147 = pneg %p64
        $region14: #{tpu_custom_call.1} parent=11 // pred_check_branch
          %149 = sbr.rel (%p147) target = $region16
        $region15: #{tpu_custom_call.1} parent=11 // pred_region
          %s151 = ssub.s32 256, 256
          %152 = vsyncadd [#allocation6], %s151
          %s153 = sshll.u32 [#allocation5], 4
          %s154 = int_to_ptr.vmem [resolvable:$true] %s153
          %159 = dma.hbm_to_vmem [thread:$0]  %s1, 256, %s154, [#allocation6], 64, 64, 4
        $region16: #{tpu_custom_call.1} parent=11 // pred_fallthru
          _
        // Predicated region
        $region17: #{tpu_custom_call.1} parent=11 // pred_check
          %p160 = pneg %p85
        $region18: #{tpu_custom_call.1} parent=11 // pred_check_branch
          %162 = sbr.rel (%p160) target = $region20
        $region19: #{tpu_custom_call.1} parent=11 // pred_region
          %s164 = ssub.s32 256, 256
          %165 = vsyncadd [#allocation6], %s164
          %s166 = sshll.u32 [#allocation7], 4
          %s167 = int_to_ptr.vmem [resolvable:$true] %s166
          %172 = dma.hbm_to_vmem [thread:$0]  %s2, 256, %s167, [#allocation6], 64, 64, 4
        $region20: #{tpu_custom_call.1} parent=11 // pred_fallthru
          _
        // Predicated region
        $region21: #{tpu_custom_call.1} parent=11 // pred_check
          %p173 = pneg %p106
        $region22: #{tpu_custom_call.1} parent=11 // pred_check_branch
          %175 = sbr.rel (%p173) target = $region24
        $region23: #{tpu_custom_call.1} parent=11 // pred_region
          _
        $region24: #{tpu_custom_call.1} parent=11 // pred_fallthru
          _
      $region12: #{tpu_custom_call.1} parent=5 // pred_fallthru
        _
      %p176 = scmp.lt.s32.totalorder %s17, 2
      // Predicated region
      $region25: #{tpu_custom_call.1} parent=5 // pred_check
        %p177 = pneg %p176
      $region26: #{tpu_custom_call.1} parent=5 // pred_check_branch
        %179 = sbr.rel (%p177) target = $region28
      $region27: #{tpu_custom_call.1} parent=5 // pred_region
        // Predicated region
        $region29: #{tpu_custom_call.1} parent=27 // pred_check
          %p180 = pneg %p37
        $region30: #{tpu_custom_call.1} parent=27 // pred_check_branch
          %182 = sbr.rel (%p180) target = $region32
        $region31: #{tpu_custom_call.1} parent=27 // pred_region
          %s183 = sand.u32 %s27, 1
          %s184 = scalar_lea.sflag [#allocation3], %s183
          %s185 = sand.u32 %s27, 1
          %s186 = smul.addr %s185, 32
          %s187 = scalar_lea.vmem [#allocation2], %s186
          %s188 = smul.u32 4, %s17
          %s190 = ssub.s32 512, 512
          %191 = vsyncadd %s184, %s190
          %s192 = smul.addr %s188, 128
          %s193 = scalar_lea.hbm %s0, %s192
          %s194 = sshll.u32 %s187, 4
          %s195 = int_to_ptr.vmem [resolvable:$true] %s194
          %200 = dma.hbm_to_vmem [thread:$0]  %s193, 512, %s195, %s184, 128, 128, 8
        $region32: #{tpu_custom_call.1} parent=27 // pred_fallthru
          _
      $region28: #{tpu_custom_call.1} parent=5 // pred_fallthru
        _
      %p201 = scmp.le.s32.totalorder 1, %s17
      %p202 = scmp.lt.s32.totalorder %s17, 3
      %p203 = pnand %p201, %p202
      %p204 = pneg %p203
      // Predicated region
      $region33: #{tpu_custom_call.1} parent=5 // pred_check
        _
      $region34: #{tpu_custom_call.1} parent=5 // pred_check_branch
        %206 = sbr.rel (%p203) target = $region36
      $region35: #{tpu_custom_call.1} parent=5 // pred_region
        %s207 = ssub.s32 %s17, 1
        %s208 = sand.u32 %s30, 1
        %s209 = scalar_lea.sflag [#allocation3], %s208
        %s210 = sand.u32 %s30, 1
        %s211 = smul.addr %s210, 32
        %s212 = scalar_lea.vmem [#allocation2], %s211
        // Predicated region
        $region37: #{tpu_custom_call.1} parent=35 // pred_check
          %p213 = pneg %p43
        $region38: #{tpu_custom_call.1} parent=35 // pred_check_branch
          %215 = sbr.rel (%p213) target = $region40
        $region39: #{tpu_custom_call.1} parent=35 // pred_region
          %216 = dma.done %s209, 512
        $region40: #{tpu_custom_call.1} parent=35 // pred_fallthru
          _
        // Predicated region
        $region41: #{tpu_custom_call.1} parent=35 // pred_check
          %p217 = pneg %p64
        $region42: #{tpu_custom_call.1} parent=35 // pred_check_branch
          %219 = sbr.rel (%p217) target = $region44
        $region43: #{tpu_custom_call.1} parent=35 // pred_region
          %220 = dma.done [#allocation6], 256
        $region44: #{tpu_custom_call.1} parent=35 // pred_fallthru
          _
        // Predicated region
        $region45: #{tpu_custom_call.1} parent=35 // pred_check
          %p221 = pneg %p85
        $region46: #{tpu_custom_call.1} parent=35 // pred_check_branch
          %223 = sbr.rel (%p221) target = $region48
        $region47: #{tpu_custom_call.1} parent=35 // pred_region
          %224 = dma.done [#allocation6], 256
        $region48: #{tpu_custom_call.1} parent=35 // pred_fallthru
          _
        %s225 = sand.u32 %s30, 1
        %s226 = scalar_lea.sflag [#allocation3], %s225
        %s227 = sand.u32 %s30, 1
        %s228 = smul.addr %s227, 32
        %s229 = scalar_lea.vmem [#allocation2], %s228
        %p230 = pneg %p43
        %p231 = pneg %p40
        %p232 = pneg %p64
        %p233 = pneg %p61
        %p234 = pneg %p85
        %p235 = pneg %p82
        %p236 = pneg %p106
        %p237 = pneg %p103
        %p238 = pneg %p132
        %p239 = pneg %p129
        %s240 = sand.u32 %s119, 1
        %s241 = scalar_lea.sflag [#allocation4], %s240
        %s242 = sand.u32 %s119, 1
        %s243 = smul.addr %s242, 32
        %s244 = scalar_lea.vmem [#allocation8], %s243
        %s245 = smul.u32 4, %s22
        %s246 = smul.u32 4, %s22
        %v248 = vld [vmem:[%s212] sm:$0xff]
        %v249 = vld [vmem:[%s212 + $0x8] sm:$0xff]
        %v250 = vld [vmem:[%s212 + $0x10] sm:$0xff]
        %v251 = vld [vmem:[%s212 + $0x18] sm:$0xff]
        %v252 = vpack.c.bf16 %v249, %v248
        %v253 = vpack.c.bf16 %v251, %v250
        %v254 = vld [vmem:[#allocation5] sm:$0xf]
        %v255 = vld [vmem:[#allocation5 + $0x4] sm:$0xf]
        %v256 = vld [vmem:[#allocation5 + $0x8] sm:$0xf]
        %v257 = vld [vmem:[#allocation5 + $0xc] sm:$0xf]
        %v262 = vunpack.c.l.b16 %v254
        %v263 = vunpack.c.l.b16 %v255
        %v264 = vunpack.c.l.b16 %v256
        %v265 = vunpack.c.l.b16 %v257
        %v266 = vpack.c.b16 %v263, %v262
        %v267 = vpack.c.b16 %v265, %v264
        %vm270 = vcmask 261120
        %v272 = vsel %vm270, %v252, 0
        %v275 = vsel %vm270, %v253, 0
        %277 = vmatprep.subr.bf16.mxu0 0
        %278 = vmatpush1.bf16.msra.mxu0 0
        %279 = vmatprep.subr.bf16.mxu0 0
        %280 = vmatpush1.bf16.msra.mxu0 0
        %281 = vmatprep.subr.bf16.mxu0 0
        %282 = vmatpush1.bf16.msra.mxu0 0
        %283 = vmatprep.subr.bf16.mxu0 0
        %284 = vmatpush1.bf16.msra.mxu0 0
        %285 = vmatprep.subr.bf16.mxu0 0
        %286 = vmatpush1.bf16.msra.mxu0 0
        %287 = vmatprep.subr.bf16.mxu0 0
        %288 = vmatpush1.bf16.msra.mxu0 0
        %289 = vmatprep.subr.bf16.mxu0 0
        %290 = vmatpush1.bf16.msra.mxu0 %v267
        %291 = vmatprep.subr.bf16.mxu0 0
        %292 = vmatpush1.bf16.msra.mxu0 %v266
        %293 = vmatprep.subr.bf16.mxu0 0
        %294 = vmatpush2.bf16.msra.mxu0 0
        %295 = vmatprep.subr.bf16.mxu0 0
        %296 = vmatpush2.bf16.msra.mxu0 0
        %297 = vmatprep.subr.bf16.mxu0 0
        %298 = vmatpush2.bf16.msra.mxu0 0
        %299 = vmatprep.subr.bf16.mxu0 0
        %300 = vmatpush2.bf16.msra.mxu0 0
        %301 = vmatprep.subr.bf16.mxu0 0
        %302 = vmatpush2.bf16.msra.mxu0 0
        %303 = vmatprep.subr.bf16.mxu0 0
        %304 = vmatpush2.bf16.msra.mxu0 0
        %305 = vmatprep.subr.bf16.mxu0 0
        %306 = vmatpush2.bf16.msra.mxu0 0
        %307 = vmatprep.subr.bf16.mxu0 0
        %308 = vmatpush2.bf16.msra.mxu0 0
        %309 = vmatprep.mubr.bf16.mxu0 0
        %310 = vmatmul.mubr.bf16.gmra.mxu0 %v272
        %v311 = vpop.f32.mrf.mxu0
        %v312 = vadd.f32 0.0, %v311
        %v313 = vpop.f32.mrf.mxu0
        %v314 = vpop.f32.mrf.mxu0
        %v315 = vadd.f32 0.0, %v314
        %v316 = vpop.f32.mrf.mxu0
        %317 = vmatprep.mubr.bf16.mxu0 0
        %318 = vmatmul.mubr.bf16.gmra.mxu0 %v275
        %v319 = vpop.f32.mrf.mxu0
        %v320 = vadd.f32 0.0, %v319
        %v321 = vpop.f32.mrf.mxu0
        %v322 = vpop.f32.mrf.mxu0
        %v323 = vadd.f32 0.0, %v322
        %v324 = vpop.f32.mrf.mxu0
        %325 = vdwg.mxu0
        %330 = vrot.lane.b32.xlu0 %v312, 120
        %v331 = vpop.permute.xlu0 %330
        %332 = vrot.lane.b32.xlu0 %v315, 120
        %v333 = vpop.permute.xlu0 %332
        %334 = vrot.lane.b32.xlu0 %v320, 120
        %v335 = vpop.permute.xlu0 %334
        %336 = vrot.lane.b32.xlu0 %v323, 120
        %v337 = vpop.permute.xlu0 %336
        %342 = vrot.lane.b32.xlu0 %v312, 112
        %v343 = vpop.permute.xlu0 %342
        %344 = vrot.lane.b32.xlu0 %v315, 112
        %v345 = vpop.permute.xlu0 %344
        %346 = vrot.lane.b32.xlu0 %v320, 112
        %v347 = vpop.permute.xlu0 %346
        %348 = vrot.lane.b32.xlu0 %v323, 112
        %v349 = vpop.permute.xlu0 %348
        %354 = vrot.lane.b32.xlu0 %v312, 104
        %v355 = vpop.permute.xlu0 %354
        %356 = vrot.lane.b32.xlu0 %v315, 104
        %v357 = vpop.permute.xlu0 %356
        %358 = vrot.lane.b32.xlu0 %v320, 104
        %v359 = vpop.permute.xlu0 %358
        %360 = vrot.lane.b32.xlu0 %v323, 104
        %v361 = vpop.permute.xlu0 %360
        %366 = vrot.lane.b32.xlu0 %v312, 96
        %v367 = vpop.permute.xlu0 %366
        %368 = vrot.lane.b32.xlu0 %v315, 96
        %v369 = vpop.permute.xlu0 %368
        %370 = vrot.lane.b32.xlu0 %v320, 96
        %v371 = vpop.permute.xlu0 %370
        %372 = vrot.lane.b32.xlu0 %v323, 96
        %v373 = vpop.permute.xlu0 %372
        %378 = vrot.lane.b32.xlu0 %v312, 88
        %v379 = vpop.permute.xlu0 %378
        %380 = vrot.lane.b32.xlu0 %v315, 88
        %v381 = vpop.permute.xlu0 %380
        %382 = vrot.lane.b32.xlu0 %v320, 88
        %v383 = vpop.permute.xlu0 %382
        %384 = vrot.lane.b32.xlu0 %v323, 88
        %v385 = vpop.permute.xlu0 %384
        %390 = vrot.lane.b32.xlu0 %v312, 80
        %v391 = vpop.permute.xlu0 %390
        %392 = vrot.lane.b32.xlu0 %v315, 80
        %v393 = vpop.permute.xlu0 %392
        %394 = vrot.lane.b32.xlu0 %v320, 80
        %v395 = vpop.permute.xlu0 %394
        %396 = vrot.lane.b32.xlu0 %v323, 80
        %v397 = vpop.permute.xlu0 %396
        %402 = vrot.lane.b32.xlu0 %v312, 72
        %v403 = vpop.permute.xlu0 %402
        %404 = vrot.lane.b32.xlu0 %v315, 72
        %v405 = vpop.permute.xlu0 %404
        %406 = vrot.lane.b32.xlu0 %v320, 72
        %v407 = vpop.permute.xlu0 %406
        %408 = vrot.lane.b32.xlu0 %v323, 72
        %v409 = vpop.permute.xlu0 %408
        %414 = vrot.lane.b32.xlu0 %v312, 64
        %v415 = vpop.permute.xlu0 %414
        %416 = vrot.lane.b32.xlu0 %v315, 64
        %v417 = vpop.permute.xlu0 %416
        %418 = vrot.lane.b32.xlu0 %v320, 64
        %v419 = vpop.permute.xlu0 %418
        %420 = vrot.lane.b32.xlu0 %v323, 64
        %v421 = vpop.permute.xlu0 %420
        %426 = vrot.lane.b32.xlu0 %v312, 56
        %v427 = vpop.permute.xlu0 %426
        %428 = vrot.lane.b32.xlu0 %v315, 56
        %v429 = vpop.permute.xlu0 %428
        %430 = vrot.lane.b32.xlu0 %v320, 56
        %v431 = vpop.permute.xlu0 %430
        %432 = vrot.lane.b32.xlu0 %v323, 56
        %v433 = vpop.permute.xlu0 %432
        %438 = vrot.lane.b32.xlu0 %v312, 48
        %v439 = vpop.permute.xlu0 %438
        %440 = vrot.lane.b32.xlu0 %v315, 48
        %v441 = vpop.permute.xlu0 %440
        %442 = vrot.lane.b32.xlu0 %v320, 48
        %v443 = vpop.permute.xlu0 %442
        %444 = vrot.lane.b32.xlu0 %v323, 48
        %v445 = vpop.permute.xlu0 %444
        %450 = vrot.lane.b32.xlu0 %v312, 40
        %v451 = vpop.permute.xlu0 %450
        %452 = vrot.lane.b32.xlu0 %v315, 40
        %v453 = vpop.permute.xlu0 %452
        %454 = vrot.lane.b32.xlu0 %v320, 40
        %v455 = vpop.permute.xlu0 %454
        %456 = vrot.lane.b32.xlu0 %v323, 40
        %v457 = vpop.permute.xlu0 %456
        %v462 = vlaneseq
        %v463 = vshrl.u32 %v462, 7
        %v464 = vlaneseq
        %v465 = vand.u32 %v464, 127
        %vm466 = vcmp.ge.s32.totalorder %v463, %v465
        %v467 = vsel %vm466, 0.0, -1e+30
        %v468 = vpack.c.bf16 %v312, %v312
        %v469 = vpack.c.bf16 %v315, %v315
        %v470 = vpack.c.bf16 %v320, %v320
        %v471 = vpack.c.bf16 %v323, %v323
        %v472 = vpack.c.bf16 %v331, %v331
        %v473 = vpack.c.bf16 %v333, %v333
        %v474 = vpack.c.bf16 %v335, %v335
        %v475 = vpack.c.bf16 %v337, %v337
        %v476 = vpack.c.bf16 %v343, %v343
        %v477 = vpack.c.bf16 %v345, %v345
        %v478 = vpack.c.bf16 %v347, %v347
        %v479 = vpack.c.bf16 %v349, %v349
        %v480 = vpack.c.bf16 %v355, %v355
        %v481 = vpack.c.bf16 %v357, %v357
        %v482 = vpack.c.bf16 %v359, %v359
        %v483 = vpack.c.bf16 %v361, %v361
        %v484 = vpack.c.bf16 %v367, %v367
        %v485 = vpack.c.bf16 %v369, %v369
        %v486 = vpack.c.bf16 %v371, %v371
        %v487 = vpack.c.bf16 %v373, %v373
        %v488 = vpack.c.bf16 %v379, %v379
        %v489 = vpack.c.bf16 %v381, %v381
        %v490 = vpack.c.bf16 %v383, %v383
        %v491 = vpack.c.bf16 %v385, %v385
        %v492 = vpack.c.bf16 %v391, %v391
        %v493 = vpack.c.bf16 %v393, %v393
        %v494 = vpack.c.bf16 %v395, %v395
        %v495 = vpack.c.bf16 %v397, %v397
        %v496 = vpack.c.bf16 %v403, %v403
        %v497 = vpack.c.bf16 %v405, %v405
        %v498 = vpack.c.bf16 %v407, %v407
        %v499 = vpack.c.bf16 %v409, %v409
        %vm500 = vcmask 64512
        %v502 = vsel %vm500, %v468, 0
        %v505 = vsel %vm500, %v484, 0
        %507 = vmatprep.subr.bf16.mxu0 0
        %508 = vmatpush1.bf16.xpose.msra.mxu0 0
        %509 = vmatprep.subr.bf16.mxu0 0
        %510 = vmatpush1.bf16.xpose.msra.mxu0 0
        %511 = vmatprep.subr.bf16.mxu0 0
        %512 = vmatpush1.bf16.xpose.msra.mxu0 0
        %513 = vmatprep.subr.bf16.mxu0 0
        %514 = vmatpush1.bf16.xpose.msra.mxu0 0
        %515 = vmatprep.subr.bf16.mxu0 0
        %516 = vmatpush1.bf16.xpose.msra.mxu0 0
        %517 = vmatprep.subr.bf16.mxu0 0
        %518 = vmatpush1.bf16.xpose.msra.mxu0 0
        %519 = vmatprep.subr.bf16.mxu0 0
        %520 = vmatpush1.bf16.xpose.msra.mxu0 0
        %521 = vmatprep.subr.bf16.mxu0 0
        %522 = vmatpush1.bf16.xpose.msra.mxu0 %v505
        %523 = vmatprep.subr.bf16.mxu0 0
        %524 = vmatpush2.bf16.xpose.msra.mxu0 0
        %525 = vmatprep.subr.bf16.mxu0 0
        %526 = vmatpush2.bf16.xpose.msra.mxu0 0
        %527 = vmatprep.subr.bf16.mxu0 0
        %528 = vmatpush2.bf16.xpose.msra.mxu0 0
        %529 = vmatprep.subr.bf16.mxu0 0
        %530 = vmatpush2.bf16.xpose.msra.mxu0 0
        %531 = vmatprep.subr.bf16.mxu0 0
        %532 = vmatpush2.bf16.xpose.msra.mxu0 0
        %533 = vmatprep.subr.bf16.mxu0 0
        %534 = vmatpush2.bf16.xpose.msra.mxu0 0
        %535 = vmatprep.subr.bf16.mxu0 0
        %536 = vmatpush2.bf16.xpose.msra.mxu0 0
        %537 = vmatprep.subr.bf16.mxu0 0
        %538 = vmatpush2.bf16.xpose.msra.mxu0 0
        %539 = vmatprep.mubr.bf16.mxu0 0
        %540 = vmatmul.mubr.bf16.gmra.mxu0 %v502
        %v541 = vpop.f32.mrf.mxu0
        %v542 = vadd.f32 0.0, %v541
        %v543 = vpop.f32.mrf.mxu0
        %v544 = vpop.f32.mrf.mxu0
        %v545 = vpop.f32.mrf.mxu0
        %546 = vdwg.mxu0
        %v548 = vsel %vm500, %v469, 0
        %v551 = vsel %vm500, %v485, 0
        %553 = vmatprep.subr.bf16.mxu0 0
        %554 = vmatpush1.bf16.xpose.msra.mxu0 0
        %555 = vmatprep.subr.bf16.mxu0 0
        %556 = vmatpush1.bf16.xpose.msra.mxu0 0
        %557 = vmatprep.subr.bf16.mxu0 0
        %558 = vmatpush1.bf16.xpose.msra.mxu0 0
        %559 = vmatprep.subr.bf16.mxu0 0
        %560 = vmatpush1.bf16.xpose.msra.mxu0 0
        %561 = vmatprep.subr.bf16.mxu0 0
        %562 = vmatpush1.bf16.xpose.msra.mxu0 0
        %563 = vmatprep.subr.bf16.mxu0 0
        %564 = vmatpush1.bf16.xpose.msra.mxu0 0
        %565 = vmatprep.subr.bf16.mxu0 0
        %566 = vmatpush1.bf16.xpose.msra.mxu0 0
        %567 = vmatprep.subr.bf16.mxu0 0
        %568 = vmatpush1.bf16.xpose.msra.mxu0 %v551
        %569 = vmatprep.subr.bf16.mxu0 0
        %570 = vmatpush2.bf16.xpose.msra.mxu0 0
        %571 = vmatprep.subr.bf16.mxu0 0
        %572 = vmatpush2.bf16.xpose.msra.mxu0 0
        %573 = vmatprep.subr.bf16.mxu0 0
        %574 = vmatpush2.bf16.xpose.msra.mxu0 0
        %575 = vmatprep.subr.bf16.mxu0 0
        %576 = vmatpush2.bf16.xpose.msra.mxu0 0
        %577 = vmatprep.subr.bf16.mxu0 0
        %578 = vmatpush2.bf16.xpose.msra.mxu0 0
        %579 = vmatprep.subr.bf16.mxu0 0
        %580 = vmatpush2.bf16.xpose.msra.mxu0 0
        %581 = vmatprep.subr.bf16.mxu0 0
        %582 = vmatpush2.bf16.xpose.msra.mxu0 0
        %583 = vmatprep.subr.bf16.mxu0 0
        %584 = vmatpush2.bf16.xpose.msra.mxu0 0
        %585 = vmatprep.mubr.bf16.mxu0 0
        %586 = vmatmul.mubr.bf16.gmra.mxu0 %v548
        %v587 = vpop.f32.mrf.mxu0
        %v588 = vadd.f32 0.0, %v587
        %v589 = vpop.f32.mrf.mxu0
        %v590 = vpop.f32.mrf.mxu0
        %v591 = vpop.f32.mrf.mxu0
        %592 = vdwg.mxu0
        %v594 = vsel %vm500, %v470, 0
        %v597 = vsel %vm500, %v486, 0
        %599 = vmatprep.subr.bf16.mxu0 0
        %600 = vmatpush1.bf16.xpose.msra.mxu0 0
        %601 = vmatprep.subr.bf16.mxu0 0
        %602 = vmatpush1.bf16.xpose.msra.mxu0 0
        %603 = vmatprep.subr.bf16.mxu0 0
        %604 = vmatpush1.bf16.xpose.msra.mxu0 0
        %605 = vmatprep.subr.bf16.mxu0 0
        %606 = vmatpush1.bf16.xpose.msra.mxu0 0
        %607 = vmatprep.subr.bf16.mxu0 0
        %608 = vmatpush1.bf16.xpose.msra.mxu0 0
        %609 = vmatprep.subr.bf16.mxu0 0
        %610 = vmatpush1.bf16.xpose.msra.mxu0 0
        %611 = vmatprep.subr.bf16.mxu0 0
        %612 = vmatpush1.bf16.xpose.msra.mxu0 0
        %613 = vmatprep.subr.bf16.mxu0 0
        %614 = vmatpush1.bf16.xpose.msra.mxu0 %v597
        %615 = vmatprep.subr.bf16.mxu0 0
        %616 = vmatpush2.bf16.xpose.msra.mxu0 0
        %617 = vmatprep.subr.bf16.mxu0 0
        %618 = vmatpush2.bf16.xpose.msra.mxu0 0
        %619 = vmatprep.subr.bf16.mxu0 0
        %620 = vmatpush2.bf16.xpose.msra.mxu0 0
        %621 = vmatprep.subr.bf16.mxu0 0
        %622 = vmatpush2.bf16.xpose.msra.mxu0 0
        %623 = vmatprep.subr.bf16.mxu0 0
        %624 = vmatpush2.bf16.xpose.msra.mxu0 0
        %625 = vmatprep.subr.bf16.mxu0 0
        %626 = vmatpush2.bf16.xpose.msra.mxu0 0
        %627 = vmatprep.subr.bf16.mxu0 0
        %628 = vmatpush2.bf16.xpose.msra.mxu0 0
        %629 = vmatprep.subr.bf16.mxu0 0
        %630 = vmatpush2.bf16.xpose.msra.mxu0 0
        %631 = vmatprep.mubr.bf16.mxu0 0
        %632 = vmatmul.mubr.bf16.gmra.mxu0 %v594
        %v633 = vpop.f32.mrf.mxu0
        %v634 = vadd.f32 0.0, %v633
        %v635 = vpop.f32.mrf.mxu0
        %v636 = vpop.f32.mrf.mxu0
        %v637 = vpop.f32.mrf.mxu0
        %638 = vdwg.mxu0
        %v640 = vsel %vm500, %v471, 0
        %v643 = vsel %vm500, %v487, 0
        %645 = vmatprep.subr.bf16.mxu0 0
        %646 = vmatpush1.bf16.xpose.msra.mxu0 0
        %647 = vmatprep.subr.bf16.mxu0 0
        %648 = vmatpush1.bf16.xpose.msra.mxu0 0
        %649 = vmatprep.subr.bf16.mxu0 0
        %650 = vmatpush1.bf16.xpose.msra.mxu0 0
        %651 = vmatprep.subr.bf16.mxu0 0
        %652 = vmatpush1.bf16.xpose.msra.mxu0 0
        %653 = vmatprep.subr.bf16.mxu0 0
        %654 = vmatpush1.bf16.xpose.msra.mxu0 0
        %655 = vmatprep.subr.bf16.mxu0 0
        %656 = vmatpush1.bf16.xpose.msra.mxu0 0
        %657 = vmatprep.subr.bf16.mxu0 0
        %658 = vmatpush1.bf16.xpose.msra.mxu0 0
        %659 = vmatprep.subr.bf16.mxu0 0
        %660 = vmatpush1.bf16.xpose.msra.mxu0 %v643
        %661 = vmatprep.subr.bf16.mxu0 0
        %662 = vmatpush2.bf16.xpose.msra.mxu0 0
        %663 = vmatprep.subr.bf16.mxu0 0
        %664 = vmatpush2.bf16.xpose.msra.mxu0 0
        %665 = vmatprep.subr.bf16.mxu0 0
        %666 = vmatpush2.bf16.xpose.msra.mxu0 0
        %667 = vmatprep.subr.bf16.mxu0 0
        %668 = vmatpush2.bf16.xpose.msra.mxu0 0
        %669 = vmatprep.subr.bf16.mxu0 0
        %670 = vmatpush2.bf16.xpose.msra.mxu0 0
        %671 = vmatprep.subr.bf16.mxu0 0
        %672 = vmatpush2.bf16.xpose.msra.mxu0 0
        %673 = vmatprep.subr.bf16.mxu0 0
        %674 = vmatpush2.bf16.xpose.msra.mxu0 0
        %675 = vmatprep.subr.bf16.mxu0 0
        %676 = vmatpush2.bf16.xpose.msra.mxu0 0
        %677 = vmatprep.mubr.bf16.mxu0 0
        %678 = vmatmul.mubr.bf16.gmra.mxu0 %v640
        %v679 = vpop.f32.mrf.mxu0
        %v680 = vadd.f32 0.0, %v679
        %v681 = vpop.f32.mrf.mxu0
        %v682 = vpop.f32.mrf.mxu0
        %v683 = vpop.f32.mrf.mxu0
        %684 = vdwg.mxu0
        %v686 = vsel %vm500, %v472, 0
        %v689 = vsel %vm500, %v488, 0
        %691 = vmatprep.subr.bf16.mxu0 0
        %692 = vmatpush1.bf16.xpose.msra.mxu0 0
        %693 = vmatprep.subr.bf16.mxu0 0
        %694 = vmatpush1.bf16.xpose.msra.mxu0 0
        %695 = vmatprep.subr.bf16.mxu0 0
        %696 = vmatpush1.bf16.xpose.msra.mxu0 0
        %697 = vmatprep.subr.bf16.mxu0 0
        %698 = vmatpush1.bf16.xpose.msra.mxu0 0
        %699 = vmatprep.subr.bf16.mxu0 0
        %700 = vmatpush1.bf16.xpose.msra.mxu0 0
        %701 = vmatprep.subr.bf16.mxu0 0
        %702 = vmatpush1.bf16.xpose.msra.mxu0 0
        %703 = vmatprep.subr.bf16.mxu0 0
        %704 = vmatpush1.bf16.xpose.msra.mxu0 0
        %705 = vmatprep.subr.bf16.mxu0 0
        %706 = vmatpush1.bf16.xpose.msra.mxu0 %v689
        %707 = vmatprep.subr.bf16.mxu0 0
        %708 = vmatpush2.bf16.xpose.msra.mxu0 0
        %709 = vmatprep.subr.bf16.mxu0 0
        %710 = vmatpush2.bf16.xpose.msra.mxu0 0
        %711 = vmatprep.subr.bf16.mxu0 0
        %712 = vmatpush2.bf16.xpose.msra.mxu0 0
        %713 = vmatprep.subr.bf16.mxu0 0
        %714 = vmatpush2.bf16.xpose.msra.mxu0 0
        %715 = vmatprep.subr.bf16.mxu0 0
        %716 = vmatpush2.bf16.xpose.msra.mxu0 0
        %717 = vmatprep.subr.bf16.mxu0 0
        %718 = vmatpush2.bf16.xpose.msra.mxu0 0
        %719 = vmatprep.subr.bf16.mxu0 0
        %720 = vmatpush2.bf16.xpose.msra.mxu0 0
        %721 = vmatprep.subr.bf16.mxu0 0
        %722 = vmatpush2.bf16.xpose.msra.mxu0 0
        %723 = vmatprep.mubr.bf16.mxu0 0
        %724 = vmatmul.mubr.bf16.gmra.mxu0 %v686
        %v725 = vpop.f32.mrf.mxu0
        %v726 = vadd.f32 0.0, %v725
        %v727 = vpop.f32.mrf.mxu0
        %v728 = vpop.f32.mrf.mxu0
        %v729 = vpop.f32.mrf.mxu0
        %730 = vdwg.mxu0
        %v732 = vsel %vm500, %v473, 0
        %v735 = vsel %vm500, %v489, 0
        %737 = vmatprep.subr.bf16.mxu0 0
        %738 = vmatpush1.bf16.xpose.msra.mxu0 0
        %739 = vmatprep.subr.bf16.mxu0 0
        %740 = vmatpush1.bf16.xpose.msra.mxu0 0
        %741 = vmatprep.subr.bf16.mxu0 0
        %742 = vmatpush1.bf16.xpose.msra.mxu0 0
        %743 = vmatprep.subr.bf16.mxu0 0
        %744 = vmatpush1.bf16.xpose.msra.mxu0 0
        %745 = vmatprep.subr.bf16.mxu0 0
        %746 = vmatpush1.bf16.xpose.msra.mxu0 0
        %747 = vmatprep.subr.bf16.mxu0 0
        %748 = vmatpush1.bf16.xpose.msra.mxu0 0
        %749 = vmatprep.subr.bf16.mxu0 0
        %750 = vmatpush1.bf16.xpose.msra.mxu0 0
        %751 = vmatprep.subr.bf16.mxu0 0
        %752 = vmatpush1.bf16.xpose.msra.mxu0 %v735
        %753 = vmatprep.subr.bf16.mxu0 0
        %754 = vmatpush2.bf16.xpose.msra.mxu0 0
        %755 = vmatprep.subr.bf16.mxu0 0
        %756 = vmatpush2.bf16.xpose.msra.mxu0 0
        %757 = vmatprep.subr.bf16.mxu0 0
        %758 = vmatpush2.bf16.xpose.msra.mxu0 0
        %759 = vmatprep.subr.bf16.mxu0 0
        %760 = vmatpush2.bf16.xpose.msra.mxu0 0
        %761 = vmatprep.subr.bf16.mxu0 0
        %762 = vmatpush2.bf16.xpose.msra.mxu0 0
        %763 = vmatprep.subr.bf16.mxu0 0
        %764 = vmatpush2.bf16.xpose.msra.mxu0 0
        %765 = vmatprep.subr.bf16.mxu0 0
        %766 = vmatpush2.bf16.xpose.msra.mxu0 0
        %767 = vmatprep.subr.bf16.mxu0 0
        %768 = vmatpush2.bf16.xpose.msra.mxu0 0
        %769 = vmatprep.mubr.bf16.mxu0 0
        %770 = vmatmul.mubr.bf16.gmra.mxu0 %v732
        %v771 = vpop.f32.mrf.mxu0
        %v772 = vadd.f32 0.0, %v771
        %v773 = vpop.f32.mrf.mxu0
        %v774 = vpop.f32.mrf.mxu0
        %v775 = vpop.f32.mrf.mxu0
        %776 = vdwg.mxu0
        %v778 = vsel %vm500, %v474, 0
        %v781 = vsel %vm500, %v490, 0
        %783 = vmatprep.subr.bf16.mxu0 0
        %784 = vmatpush1.bf16.xpose.msra.mxu0 0
        %785 = vmatprep.subr.bf16.mxu0 0
        %786 = vmatpush1.bf16.xpose.msra.mxu0 0
        %787 = vmatprep.subr.bf16.mxu0 0
        %788 = vmatpush1.bf16.xpose.msra.mxu0 0
        %789 = vmatprep.subr.bf16.mxu0 0
        %790 = vmatpush1.bf16.xpose.msra.mxu0 0
        %791 = vmatprep.subr.bf16.mxu0 0
        %792 = vmatpush1.bf16.xpose.msra.mxu0 0
        %793 = vmatprep.subr.bf16.mxu0 0
        %794 = vmatpush1.bf16.xpose.msra.mxu0 0
        %795 = vmatprep.subr.bf16.mxu0 0
        %796 = vmatpush1.bf16.xpose.msra.mxu0 0
        %797 = vmatprep.subr.bf16.mxu0 0
        %798 = vmatpush1.bf16.xpose.msra.mxu0 %v781
        %799 = vmatprep.subr.bf16.mxu0 0
        %800 = vmatpush2.bf16.xpose.msra.mxu0 0
        %801 = vmatprep.subr.bf16.mxu0 0
        %802 = vmatpush2.bf16.xpose.msra.mxu0 0
        %803 = vmatprep.subr.bf16.mxu0 0
        %804 = vmatpush2.bf16.xpose.msra.mxu0 0
        %805 = vmatprep.subr.bf16.mxu0 0
        %806 = vmatpush2.bf16.xpose.msra.mxu0 0
        %807 = vmatprep.subr.bf16.mxu0 0
        %808 = vmatpush2.bf16.xpose.msra.mxu0 0
        %809 = vmatprep.subr.bf16.mxu0 0
        %810 = vmatpush2.bf16.xpose.msra.mxu0 0
        %811 = vmatprep.subr.bf16.mxu0 0
        %812 = vmatpush2.bf16.xpose.msra.mxu0 0
        %813 = vmatprep.subr.bf16.mxu0 0
        %814 = vmatpush2.bf16.xpose.msra.mxu0 0
        %815 = vmatprep.mubr.bf16.mxu0 0
        %816 = vmatmul.mubr.bf16.gmra.mxu0 %v778
        %v817 = vpop.f32.mrf.mxu0
        %v818 = vadd.f32 0.0, %v817
        %v819 = vpop.f32.mrf.mxu0
        %v820 = vpop.f32.mrf.mxu0
        %v821 = vpop.f32.mrf.mxu0
        %822 = vdwg.mxu0
        %v824 = vsel %vm500, %v475, 0
        %v827 = vsel %vm500, %v491, 0
        %829 = vmatprep.subr.bf16.mxu0 0
        %830 = vmatpush1.bf16.xpose.msra.mxu0 0
        %831 = vmatprep.subr.bf16.mxu0 0
        %832 = vmatpush1.bf16.xpose.msra.mxu0 0
        %833 = vmatprep.subr.bf16.mxu0 0
        %834 = vmatpush1.bf16.xpose.msra.mxu0 0
        %835 = vmatprep.subr.bf16.mxu0 0
        %836 = vmatpush1.bf16.xpose.msra.mxu0 0
        %837 = vmatprep.subr.bf16.mxu0 0
        %838 = vmatpush1.bf16.xpose.msra.mxu0 0
        %839 = vmatprep.subr.bf16.mxu0 0
        %840 = vmatpush1.bf16.xpose.msra.mxu0 0
        %841 = vmatprep.subr.bf16.mxu0 0
        %842 = vmatpush1.bf16.xpose.msra.mxu0 0
        %843 = vmatprep.subr.bf16.mxu0 0
        %844 = vmatpush1.bf16.xpose.msra.mxu0 %v827
        %845 = vmatprep.subr.bf16.mxu0 0
        %846 = vmatpush2.bf16.xpose.msra.mxu0 0
        %847 = vmatprep.subr.bf16.mxu0 0
        %848 = vmatpush2.bf16.xpose.msra.mxu0 0
        %849 = vmatprep.subr.bf16.mxu0 0
        %850 = vmatpush2.bf16.xpose.msra.mxu0 0
        %851 = vmatprep.subr.bf16.mxu0 0
        %852 = vmatpush2.bf16.xpose.msra.mxu0 0
        %853 = vmatprep.subr.bf16.mxu0 0
        %854 = vmatpush2.bf16.xpose.msra.mxu0 0
        %855 = vmatprep.subr.bf16.mxu0 0
        %856 = vmatpush2.bf16.xpose.msra.mxu0 0
        %857 = vmatprep.subr.bf16.mxu0 0
        %858 = vmatpush2.bf16.xpose.msra.mxu0 0
        %859 = vmatprep.subr.bf16.mxu0 0
        %860 = vmatpush2.bf16.xpose.msra.mxu0 0
        %861 = vmatprep.mubr.bf16.mxu0 0
        %862 = vmatmul.mubr.bf16.gmra.mxu0 %v824
        %v863 = vpop.f32.mrf.mxu0
        %v864 = vadd.f32 0.0, %v863
        %v865 = vpop.f32.mrf.mxu0
        %v866 = vpop.f32.mrf.mxu0
        %v867 = vpop.f32.mrf.mxu0
        %868 = vdwg.mxu0
        %v870 = vsel %vm500, %v476, 0
        %v873 = vsel %vm500, %v492, 0
        %875 = vmatprep.subr.bf16.mxu0 0
        %876 = vmatpush1.bf16.xpose.msra.mxu0 0
        %877 = vmatprep.subr.bf16.mxu0 0
        %878 = vmatpush1.bf16.xpose.msra.mxu0 0
        %879 = vmatprep.subr.bf16.mxu0 0
        %880 = vmatpush1.bf16.xpose.msra.mxu0 0
        %881 = vmatprep.subr.bf16.mxu0 0
        %882 = vmatpush1.bf16.xpose.msra.mxu0 0
        %883 = vmatprep.subr.bf16.mxu0 0
        %884 = vmatpush1.bf16.xpose.msra.mxu0 0
        %885 = vmatprep.subr.bf16.mxu0 0
        %886 = vmatpush1.bf16.xpose.msra.mxu0 0
        %887 = vmatprep.subr.bf16.mxu0 0
        %888 = vmatpush1.bf16.xpose.msra.mxu0 0
        %889 = vmatprep.subr.bf16.mxu0 0
        %890 = vmatpush1.bf16.xpose.msra.mxu0 %v873
        %891 = vmatprep.subr.bf16.mxu0 0
        %892 = vmatpush2.bf16.xpose.msra.mxu0 0
        %893 = vmatprep.subr.bf16.mxu0 0
        %894 = vmatpush2.bf16.xpose.msra.mxu0 0
        %895 = vmatprep.subr.bf16.mxu0 0
        %896 = vmatpush2.bf16.xpose.msra.mxu0 0
        %897 = vmatprep.subr.bf16.mxu0 0
        %898 = vmatpush2.bf16.xpose.msra.mxu0 0
        %899 = vmatprep.subr.bf16.mxu0 0
        %900 = vmatpush2.bf16.xpose.msra.mxu0 0
        %901 = vmatprep.subr.bf16.mxu0 0
        %902 = vmatpush2.bf16.xpose.msra.mxu0 0
        %903 = vmatprep.subr.bf16.mxu0 0
        %904 = vmatpush2.bf16.xpose.msra.mxu0 0
        %905 = vmatprep.subr.bf16.mxu0 0
        %906 = vmatpush2.bf16.xpose.msra.mxu0 0
        %907 = vmatprep.mubr.bf16.mxu0 0
        %908 = vmatmul.mubr.bf16.gmra.mxu0 %v870
        %v909 = vpop.f32.mrf.mxu0
        %v910 = vadd.f32 0.0, %v909
        %v911 = vpop.f32.mrf.mxu0
        %v912 = vpop.f32.mrf.mxu0
        %v913 = vpop.f32.mrf.mxu0
        %914 = vdwg.mxu0
        %v916 = vsel %vm500, %v477, 0
        %v919 = vsel %vm500, %v493, 0
        %921 = vmatprep.subr.bf16.mxu0 0
        %922 = vmatpush1.bf16.xpose.msra.mxu0 0
        %923 = vmatprep.subr.bf16.mxu0 0
        %924 = vmatpush1.bf16.xpose.msra.mxu0 0
        %925 = vmatprep.subr.bf16.mxu0 0
        %926 = vmatpush1.bf16.xpose.msra.mxu0 0
        %927 = vmatprep.subr.bf16.mxu0 0
        %928 = vmatpush1.bf16.xpose.msra.mxu0 0
        %929 = vmatprep.subr.bf16.mxu0 0
        %930 = vmatpush1.bf16.xpose.msra.mxu0 0
        %931 = vmatprep.subr.bf16.mxu0 0
        %932 = vmatpush1.bf16.xpose.msra.mxu0 0
        %933 = vmatprep.subr.bf16.mxu0 0
        %934 = vmatpush1.bf16.xpose.msra.mxu0 0
        %935 = vmatprep.subr.bf16.mxu0 0
        %936 = vmatpush1.bf16.xpose.msra.mxu0 %v919
        %937 = vmatprep.subr.bf16.mxu0 0
        %938 = vmatpush2.bf16.xpose.msra.mxu0 0
        %939 = vmatprep.subr.bf16.mxu0 0
        %940 = vmatpush2.bf16.xpose.msra.mxu0 0
        %941 = vmatprep.subr.bf16.mxu0 0
        %942 = vmatpush2.bf16.xpose.msra.mxu0 0
        %943 = vmatprep.subr.bf16.mxu0 0
        %944 = vmatpush2.bf16.xpose.msra.mxu0 0
        %945 = vmatprep.subr.bf16.mxu0 0
        %946 = vmatpush2.bf16.xpose.msra.mxu0 0
        %947 = vmatprep.subr.bf16.mxu0 0
        %948 = vmatpush2.bf16.xpose.msra.mxu0 0
        %949 = vmatprep.subr.bf16.mxu0 0
        %950 = vmatpush2.bf16.xpose.msra.mxu0 0
        %951 = vmatprep.subr.bf16.mxu0 0
        %952 = vmatpush2.bf16.xpose.msra.mxu0 0
        %953 = vmatprep.mubr.bf16.mxu0 0
        %954 = vmatmul.mubr.bf16.gmra.mxu0 %v916
        %v955 = vpop.f32.mrf.mxu0
        %v956 = vadd.f32 0.0, %v955
        %v957 = vpop.f32.mrf.mxu0
        %v958 = vpop.f32.mrf.mxu0
        %v959 = vpop.f32.mrf.mxu0
        %960 = vdwg.mxu0
        %v962 = vsel %vm500, %v478, 0
        %v965 = vsel %vm500, %v494, 0
        %967 = vmatprep.subr.bf16.mxu0 0
        %968 = vmatpush1.bf16.xpose.msra.mxu0 0
        %969 = vmatprep.subr.bf16.mxu0 0
        %970 = vmatpush1.bf16.xpose.msra.mxu0 0
        %971 = vmatprep.subr.bf16.mxu0 0
        %972 = vmatpush1.bf16.xpose.msra.mxu0 0
        %973 = vmatprep.subr.bf16.mxu0 0
        %974 = vmatpush1.bf16.xpose.msra.mxu0 0
        %975 = vmatprep.subr.bf16.mxu0 0
        %976 = vmatpush1.bf16.xpose.msra.mxu0 0
        %977 = vmatprep.subr.bf16.mxu0 0
        %978 = vmatpush1.bf16.xpose.msra.mxu0 0
        %979 = vmatprep.subr.bf16.mxu0 0
        %980 = vmatpush1.bf16.xpose.msra.mxu0 0
        %981 = vmatprep.subr.bf16.mxu0 0
        %982 = vmatpush1.bf16.xpose.msra.mxu0 %v965
        %983 = vmatprep.subr.bf16.mxu0 0
        %984 = vmatpush2.bf16.xpose.msra.mxu0 0
        %985 = vmatprep.subr.bf16.mxu0 0
        %986 = vmatpush2.bf16.xpose.msra.mxu0 0
        %987 = vmatprep.subr.bf16.mxu0 0
        %988 = vmatpush2.bf16.xpose.msra.mxu0 0
        %989 = vmatprep.subr.bf16.mxu0 0
        %990 = vmatpush2.bf16.xpose.msra.mxu0 0
        %991 = vmatprep.subr.bf16.mxu0 0
        %992 = vmatpush2.bf16.xpose.msra.mxu0 0
        %993 = vmatprep.subr.bf16.mxu0 0
        %994 = vmatpush2.bf16.xpose.msra.mxu0 0
        %995 = vmatprep.subr.bf16.mxu0 0
        %996 = vmatpush2.bf16.xpose.msra.mxu0 0
        %997 = vmatprep.subr.bf16.mxu0 0
        %998 = vmatpush2.bf16.xpose.msra.mxu0 0
        %999 = vmatprep.mubr.bf16.mxu0 0
        %1000 = vmatmul.mubr.bf16.gmra.mxu0 %v962
        %v1001 = vpop.f32.mrf.mxu0
        %v1002 = vadd.f32 0.0, %v1001
        %v1003 = vpop.f32.mrf.mxu0
        %v1004 = vpop.f32.mrf.mxu0
        %v1005 = vpop.f32.mrf.mxu0
        %1006 = vdwg.mxu0
        %v1008 = vsel %vm500, %v479, 0
        %v1011 = vsel %vm500, %v495, 0
        %1013 = vmatprep.subr.bf16.mxu0 0
        %1014 = vmatpush1.bf16.xpose.msra.mxu0 0
        %1015 = vmatprep.subr.bf16.mxu0 0
        %1016 = vmatpush1.bf16.xpose.msra.mxu0 0
        %1017 = vmatprep.subr.bf16.mxu0 0
        %1018 = vmatpush1.bf16.xpose.msra.mxu0 0
        %1019 = vmatprep.subr.bf16.mxu0 0
        %1020 = vmatpush1.bf16.xpose.msra.mxu0 0
        %1021 = vmatprep.subr.bf16.mxu0 0
        %1022 = vmatpush1.bf16.xpose.msra.mxu0 0
        %1023 = vmatprep.subr.bf16.mxu0 0
        %1024 = vmatpush1.bf16.xpose.msra.mxu0 0
        %1025 = vmatprep.subr.bf16.mxu0 0
        %1026 = vmatpush1.bf16.xpose.msra.mxu0 0
        %1027 = vmatprep.subr.bf16.mxu0 0
        %1028 = vmatpush1.bf16.xpose.msra.mxu0 %v1011
        %1029 = vmatprep.subr.bf16.mxu0 0
        %1030 = vmatpush2.bf16.xpose.msra.mxu0 0
        %1031 = vmatprep.subr.bf16.mxu0 0
        %1032 = vmatpush2.bf16.xpose.msra.mxu0 0
        %1033 = vmatprep.subr.bf16.mxu0 0
        %1034 = vmatpush2.bf16.xpose.msra.mxu0 0
        %1035 = vmatprep.subr.bf16.mxu0 0
        %1036 = vmatpush2.bf16.xpose.msra.mxu0 0
        %1037 = vmatprep.subr.bf16.mxu0 0
        %1038 = vmatpush2.bf16.xpose.msra.mxu0 0
        %1039 = vmatprep.subr.bf16.mxu0 0
        %1040 = vmatpush2.bf16.xpose.msra.mxu0 0
        %1041 = vmatprep.subr.bf16.mxu0 0
        %1042 = vmatpush2.bf16.xpose.msra.mxu0 0
        %1043 = vmatprep.subr.bf16.mxu0 0
        %1044 = vmatpush2.bf16.xpose.msra.mxu0 0
        %1045 = vmatprep.mubr.bf16.mxu0 0
        %1046 = vmatmul.mubr.bf16.gmra.mxu0 %v1008
        %v1047 = vpop.f32.mrf.mxu0
        %v1048 = vadd.f32 0.0, %v1047
        %v1049 = vpop.f32.mrf.mxu0
        %v1050 = vpop.f32.mrf.mxu0
        %v1051 = vpop.f32.mrf.mxu0
        %1052 = vdwg.mxu0
        %v1054 = vsel %vm500, %v480, 0
        %v1057 = vsel %vm500, %v496, 0
        %1059 = vmatprep.subr.bf16.mxu0 0
        %1060 = vmatpush1.bf16.xpose.msra.mxu0 0
        %1061 = vmatprep.subr.bf16.mxu0 0
        %1062 = vmatpush1.bf16.xpose.msra.mxu0 0
        %1063 = vmatprep.subr.bf16.mxu0 0
        %1064 = vmatpush1.bf16.xpose.msra.mxu0 0
        %1065 = vmatprep.subr.bf16.mxu0 0
        %1066 = vmatpush1.bf16.xpose.msra.mxu0 0
        %1067 = vmatprep.subr.bf16.mxu0 0
        %1068 = vmatpush1.bf16.xpose.msra.mxu0 0
        %1069 = vmatprep.subr.bf16.mxu0 0
        %1070 = vmatpush1.bf16.xpose.msra.mxu0 0
        %1071 = vmatprep.subr.bf16.mxu0 0
        %1072 = vmatpush1.bf16.xpose.msra.mxu0 0
        %1073 = vmatprep.subr.bf16.mxu0 0
        %1074 = vmatpush1.bf16.xpose.msra.mxu0 %v1057
        %1075 = vmatprep.subr.bf16.mxu0 0
        %1076 = vmatpush2.bf16.xpose.msra.mxu0 0
        %1077 = vmatprep.subr.bf16.mxu0 0
        %1078 = vmatpush2.bf16.xpose.msra.mxu0 0
        %1079 = vmatprep.subr.bf16.mxu0 0
        %1080 = vmatpush2.bf16.xpose.msra.mxu0 0
        %1081 = vmatprep.subr.bf16.mxu0 0
        %1082 = vmatpush2.bf16.xpose.msra.mxu0 0
        %1083 = vmatprep.subr.bf16.mxu0 0
        %1084 = vmatpush2.bf16.xpose.msra.mxu0 0
        %1085 = vmatprep.subr.bf16.mxu0 0
        %1086 = vmatpush2.bf16.xpose.msra.mxu0 0
        %1087 = vmatprep.subr.bf16.mxu0 0
        %1088 = vmatpush2.bf16.xpose.msra.mxu0 0
        %1089 = vmatprep.subr.bf16.mxu0 0
        %1090 = vmatpush2.bf16.xpose.msra.mxu0 0
        %1091 = vmatprep.mubr.bf16.mxu0 0
        %1092 = vmatmul.mubr.bf16.gmra.mxu0 %v1054
        %v1093 = vpop.f32.mrf.mxu0
        %v1094 = vadd.f32 0.0, %v1093
        %v1095 = vpop.f32.mrf.mxu0
        %v1096 = vpop.f32.mrf.mxu0
        %v1097 = vpop.f32.mrf.mxu0
        %1098 = vdwg.mxu0
        %v1100 = vsel %vm500, %v481, 0
        %v1103 = vsel %vm500, %v497, 0
        %1105 = vmatprep.subr.bf16.mxu0 0
        %1106 = vmatpush1.bf16.xpose.msra.mxu0 0
        %1107 = vmatprep.subr.bf16.mxu0 0
        %1108 = vmatpush1.bf16.xpose.msra.mxu0 0
        %1109 = vmatprep.subr.bf16.mxu0 0
        %1110 = vmatpush1.bf16.xpose.msra.mxu0 0
        %1111 = vmatprep.subr.bf16.mxu0 0
        %1112 = vmatpush1.bf16.xpose.msra.mxu0 0
        %1113 = vmatprep.subr.bf16.mxu0 0
        %1114 = vmatpush1.bf16.xpose.msra.mxu0 0
        %1115 = vmatprep.subr.bf16.mxu0 0
        %1116 = vmatpush1.bf16.xpose.msra.mxu0 0
        %1117 = vmatprep.subr.bf16.mxu0 0
        %1118 = vmatpush1.bf16.xpose.msra.mxu0 0
        %1119 = vmatprep.subr.bf16.mxu0 0
        %1120 = vmatpush1.bf16.xpose.msra.mxu0 %v1103
        %1121 = vmatprep.subr.bf16.mxu0 0
        %1122 = vmatpush2.bf16.xpose.msra.mxu0 0
        %1123 = vmatprep.subr.bf16.mxu0 0
        %1124 = vmatpush2.bf16.xpose.msra.mxu0 0
        %1125 = vmatprep.subr.bf16.mxu0 0
        %1126 = vmatpush2.bf16.xpose.msra.mxu0 0
        %1127 = vmatprep.subr.bf16.mxu0 0
        %1128 = vmatpush2.bf16.xpose.msra.mxu0 0
        %1129 = vmatprep.subr.bf16.mxu0 0
        %1130 = vmatpush2.bf16.xpose.msra.mxu0 0
        %1131 = vmatprep.subr.bf16.mxu0 0
        %1132 = vmatpush2.bf16.xpose.msra.mxu0 0
        %1133 = vmatprep.subr.bf16.mxu0 0
        %1134 = vmatpush2.bf16.xpose.msra.mxu0 0
        %1135 = vmatprep.subr.bf16.mxu0 0
        %1136 = vmatpush2.bf16.xpose.msra.mxu0 0
        %1137 = vmatprep.mubr.bf16.mxu0 0
        %1138 = vmatmul.mubr.bf16.gmra.mxu0 %v1100
        %v1139 = vpop.f32.mrf.mxu0
        %v1140 = vadd.f32 0.0, %v1139
        %v1141 = vpop.f32.mrf.mxu0
        %v1142 = vpop.f32.mrf.mxu0
        %v1143 = vpop.f32.mrf.mxu0
        %1144 = vdwg.mxu0
        %v1146 = vsel %vm500, %v482, 0
        %v1149 = vsel %vm500, %v498, 0
        %1151 = vmatprep.subr.bf16.mxu0 0
        %1152 = vmatpush1.bf16.xpose.msra.mxu0 0
        %1153 = vmatprep.subr.bf16.mxu0 0
        %1154 = vmatpush1.bf16.xpose.msra.mxu0 0
        %1155 = vmatprep.subr.bf16.mxu0 0
        %1156 = vmatpush1.bf16.xpose.msra.mxu0 0
        %1157 = vmatprep.subr.bf16.mxu0 0
        %1158 = vmatpush1.bf16.xpose.msra.mxu0 0
        %1159 = vmatprep.subr.bf16.mxu0 0
        %1160 = vmatpush1.bf16.xpose.msra.mxu0 0
        %1161 = vmatprep.subr.bf16.mxu0 0
        %1162 = vmatpush1.bf16.xpose.msra.mxu0 0
        %1163 = vmatprep.subr.bf16.mxu0 0
        %1164 = vmatpush1.bf16.xpose.msra.mxu0 0
        %1165 = vmatprep.subr.bf16.mxu0 0
        %1166 = vmatpush1.bf16.xpose.msra.mxu0 %v1149
        %1167 = vmatprep.subr.bf16.mxu0 0
        %1168 = vmatpush2.bf16.xpose.msra.mxu0 0
        %1169 = vmatprep.subr.bf16.mxu0 0
        %1170 = vmatpush2.bf16.xpose.msra.mxu0 0
        %1171 = vmatprep.subr.bf16.mxu0 0
        %1172 = vmatpush2.bf16.xpose.msra.mxu0 0
        %1173 = vmatprep.subr.bf16.mxu0 0
        %1174 = vmatpush2.bf16.xpose.msra.mxu0 0
        %1175 = vmatprep.subr.bf16.mxu0 0
        %1176 = vmatpush2.bf16.xpose.msra.mxu0 0
        %1177 = vmatprep.subr.bf16.mxu0 0
        %1178 = vmatpush2.bf16.xpose.msra.mxu0 0
        %1179 = vmatprep.subr.bf16.mxu0 0
        %1180 = vmatpush2.bf16.xpose.msra.mxu0 0
        %1181 = vmatprep.subr.bf16.mxu0 0
        %1182 = vmatpush2.bf16.xpose.msra.mxu0 0
        %1183 = vmatprep.mubr.bf16.mxu0 0
        %1184 = vmatmul.mubr.bf16.gmra.mxu0 %v1146
        %v1185 = vpop.f32.mrf.mxu0
        %v1186 = vadd.f32 0.0, %v1185
        %v1187 = vpop.f32.mrf.mxu0
        %v1188 = vpop.f32.mrf.mxu0
        %v1189 = vpop.f32.mrf.mxu0
        %1190 = vdwg.mxu0
        %v1192 = vsel %vm500, %v483, 0
        %v1195 = vsel %vm500, %v499, 0
        %1197 = vmatprep.subr.bf16.mxu0 0
        %1198 = vmatpush1.bf16.xpose.msra.mxu0 0
        %1199 = vmatprep.subr.bf16.mxu0 0
        %1200 = vmatpush1.bf16.xpose.msra.mxu0 0
        %1201 = vmatprep.subr.bf16.mxu0 0
        %1202 = vmatpush1.bf16.xpose.msra.mxu0 0
        %1203 = vmatprep.subr.bf16.mxu0 0
        %1204 = vmatpush1.bf16.xpose.msra.mxu0 0
        %1205 = vmatprep.subr.bf16.mxu0 0
        %1206 = vmatpush1.bf16.xpose.msra.mxu0 0
        %1207 = vmatprep.subr.bf16.mxu0 0
        %1208 = vmatpush1.bf16.xpose.msra.mxu0 0
        %1209 = vmatprep.subr.bf16.mxu0 0
        %1210 = vmatpush1.bf16.xpose.msra.mxu0 0
        %1211 = vmatprep.subr.bf16.mxu0 0
        %1212 = vmatpush1.bf16.xpose.msra.mxu0 %v1195
        %1213 = vmatprep.subr.bf16.mxu0 0
        %1214 = vmatpush2.bf16.xpose.msra.mxu0 0
        %1215 = vmatprep.subr.bf16.mxu0 0
        %1216 = vmatpush2.bf16.xpose.msra.mxu0 0
        %1217 = vmatprep.subr.bf16.mxu0 0
        %1218 = vmatpush2.bf16.xpose.msra.mxu0 0
        %1219 = vmatprep.subr.bf16.mxu0 0
        %1220 = vmatpush2.bf16.xpose.msra.mxu0 0
        %1221 = vmatprep.subr.bf16.mxu0 0
        %1222 = vmatpush2.bf16.xpose.msra.mxu0 0
        %1223 = vmatprep.subr.bf16.mxu0 0
        %1224 = vmatpush2.bf16.xpose.msra.mxu0 0
        %1225 = vmatprep.subr.bf16.mxu0 0
        %1226 = vmatpush2.bf16.xpose.msra.mxu0 0
        %1227 = vmatprep.subr.bf16.mxu0 0
        %1228 = vmatpush2.bf16.xpose.msra.mxu0 0
        %1229 = vmatprep.mubr.bf16.mxu0 0
        %1230 = vmatmul.mubr.bf16.gmra.mxu0 %v1192
        %v1231 = vpop.f32.mrf.mxu0
        %v1232 = vadd.f32 0.0, %v1231
        %v1233 = vpop.f32.mrf.mxu0
        %v1234 = vpop.f32.mrf.mxu0
        %v1235 = vpop.f32.mrf.mxu0
        %1236 = vdwg.mxu0
        %v1237 = vmul.f32 %v542, 0.125
        %v1238 = vmul.f32 %v588, 0.125
        %v1239 = vmul.f32 %v634, 0.125
        %v1240 = vmul.f32 %v680, 0.125
        %v1241 = vmul.f32 %v726, 0.125
        %v1242 = vmul.f32 %v772, 0.125
        %v1243 = vmul.f32 %v818, 0.125
        %v1244 = vmul.f32 %v864, 0.125
        %v1245 = vmul.f32 %v910, 0.125
        %v1246 = vmul.f32 %v956, 0.125
        %v1247 = vmul.f32 %v1002, 0.125
        %v1248 = vmul.f32 %v1048, 0.125
        %v1249 = vmul.f32 %v1094, 0.125
        %v1250 = vmul.f32 %v1140, 0.125
        %v1251 = vmul.f32 %v1186, 0.125
        %v1252 = vmul.f32 %v1232, 0.125
        %v1253 = vadd.f32 %v1237, %v467
        %v1254 = vadd.f32 %v1238, %v467
        %v1255 = vadd.f32 %v1239, %v467
        %v1256 = vadd.f32 %v1240, %v467
        %v1257 = vadd.f32 %v1241, %v467
        %v1258 = vadd.f32 %v1242, %v467
        %v1259 = vadd.f32 %v1243, %v467
        %v1260 = vadd.f32 %v1244, %v467
        %v1261 = vadd.f32 %v1245, %v467
        %v1262 = vadd.f32 %v1246, %v467
        %v1263 = vadd.f32 %v1247, %v467
        %v1264 = vadd.f32 %v1248, %v467
        %v1265 = vadd.f32 %v1249, %v467
        %v1266 = vadd.f32 %v1250, %v467
        %v1267 = vadd.f32 %v1251, %v467
        %v1268 = vadd.f32 %v1252, %v467
        %v1269 = vsel %vm500, %v1253, -inf
        %1270 = vmax.xlane.f32.xlu0 %v1269
        %v1271 = vpop.xlane.xlu0 %1270
        %v1272 = vsel %vm500, %v1254, -inf
        %1273 = vmax.xlane.f32.xlu0 %v1272
        %v1274 = vpop.xlane.xlu0 %1273
        %v1275 = vsel %vm500, %v1255, -inf
        %1276 = vmax.xlane.f32.xlu0 %v1275
        %v1277 = vpop.xlane.xlu0 %1276
        %v1278 = vsel %vm500, %v1256, -inf
        %1279 = vmax.xlane.f32.xlu0 %v1278
        %v1280 = vpop.xlane.xlu0 %1279
        %v1281 = vsel %vm500, %v1257, -inf
        %1282 = vmax.xlane.f32.xlu0 %v1281
        %v1283 = vpop.xlane.xlu0 %1282
        %v1284 = vsel %vm500, %v1258, -inf
        %1285 = vmax.xlane.f32.xlu0 %v1284
        %v1286 = vpop.xlane.xlu0 %1285
        %v1287 = vsel %vm500, %v1259, -inf
        %1288 = vmax.xlane.f32.xlu0 %v1287
        %v1289 = vpop.xlane.xlu0 %1288
        %v1290 = vsel %vm500, %v1260, -inf
        %1291 = vmax.xlane.f32.xlu0 %v1290
        %v1292 = vpop.xlane.xlu0 %1291
        %v1293 = vsel %vm500, %v1261, -inf
        %1294 = vmax.xlane.f32.xlu0 %v1293
        %v1295 = vpop.xlane.xlu0 %1294
        %v1296 = vsel %vm500, %v1262, -inf
        %1297 = vmax.xlane.f32.xlu0 %v1296
        %v1298 = vpop.xlane.xlu0 %1297
        %v1299 = vsel %vm500, %v1263, -inf
        %1300 = vmax.xlane.f32.xlu0 %v1299
        %v1301 = vpop.xlane.xlu0 %1300
        %v1302 = vsel %vm500, %v1264, -inf
        %1303 = vmax.xlane.f32.xlu0 %v1302
        %v1304 = vpop.xlane.xlu0 %1303
        %v1305 = vsel %vm500, %v1265, -inf
        %1306 = vmax.xlane.f32.xlu0 %v1305
        %v1307 = vpop.xlane.xlu0 %1306
        %v1308 = vsel %vm500, %v1266, -inf
        %1309 = vmax.xlane.f32.xlu0 %v1308
        %v1310 = vpop.xlane.xlu0 %1309
        %v1311 = vsel %vm500, %v1267, -inf
        %1312 = vmax.xlane.f32.xlu0 %v1311
        %v1313 = vpop.xlane.xlu0 %1312
        %v1314 = vsel %vm500, %v1268, -inf
        %1315 = vmax.xlane.f32.xlu0 %v1314
        %v1316 = vpop.xlane.xlu0 %1315
        %v1317 = vsub.f32 %v1253, %v1271
        %v1318 = vsub.f32 %v1254, %v1274
        %v1319 = vsub.f32 %v1255, %v1277
        %v1320 = vsub.f32 %v1256, %v1280
        %v1321 = vsub.f32 %v1257, %v1283
        %v1322 = vsub.f32 %v1258, %v1286
        %v1323 = vsub.f32 %v1259, %v1289
        %v1324 = vsub.f32 %v1260, %v1292
        %v1325 = vsub.f32 %v1261, %v1295
        %v1326 = vsub.f32 %v1262, %v1298
        %v1327 = vsub.f32 %v1263, %v1301
        %v1328 = vsub.f32 %v1264, %v1304
        %v1329 = vsub.f32 %v1265, %v1307
        %v1330 = vsub.f32 %v1266, %v1310
        %v1331 = vsub.f32 %v1267, %v1313
        %v1332 = vsub.f32 %v1268, %v1316
        %v1333 = vmul.f32 %v1317, 1.442695
        %v1334 = vpow.pop %v1333
        %v1335 = vmul.f32 %v1318, 1.442695
        %v1336 = vpow.pop %v1335
        %v1337 = vmul.f32 %v1319, 1.442695
        %v1338 = vpow.pop %v1337
        %v1339 = vmul.f32 %v1320, 1.442695
        %v1340 = vpow.pop %v1339
        %v1341 = vmul.f32 %v1321, 1.442695
        %v1342 = vpow.pop %v1341
        %v1343 = vmul.f32 %v1322, 1.442695
        %v1344 = vpow.pop %v1343
        %v1345 = vmul.f32 %v1323, 1.442695
        %v1346 = vpow.pop %v1345
        %v1347 = vmul.f32 %v1324, 1.442695
        %v1348 = vpow.pop %v1347
        %v1349 = vmul.f32 %v1325, 1.442695
        %v1350 = vpow.pop %v1349
        %v1351 = vmul.f32 %v1326, 1.442695
        %v1352 = vpow.pop %v1351
        %v1353 = vmul.f32 %v1327, 1.442695
        %v1354 = vpow.pop %v1353
        %v1355 = vmul.f32 %v1328, 1.442695
        %v1356 = vpow.pop %v1355
        %v1357 = vmul.f32 %v1329, 1.442695
        %v1358 = vpow.pop %v1357
        %v1359 = vmul.f32 %v1330, 1.442695
        %v1360 = vpow.pop %v1359
        %v1361 = vmul.f32 %v1331, 1.442695
        %v1362 = vpow.pop %v1361
        %v1363 = vmul.f32 %v1332, 1.442695
        %v1364 = vpow.pop %v1363
        %v1365 = vsel %vm500, %v1334, 0.0
        %1366 = vadd.xlane.f32.xlu0 %v1365
        %v1367 = vpop.xlane.xlu0 %1366
        %v1368 = vsel %vm500, %v1336, 0.0
        %1369 = vadd.xlane.f32.xlu0 %v1368
        %v1370 = vpop.xlane.xlu0 %1369
        %v1371 = vsel %vm500, %v1338, 0.0
        %1372 = vadd.xlane.f32.xlu0 %v1371
        %v1373 = vpop.xlane.xlu0 %1372
        %v1374 = vsel %vm500, %v1340, 0.0
        %1375 = vadd.xlane.f32.xlu0 %v1374
        %v1376 = vpop.xlane.xlu0 %1375
        %v1377 = vsel %vm500, %v1342, 0.0
        %1378 = vadd.xlane.f32.xlu0 %v1377
        %v1379 = vpop.xlane.xlu0 %1378
        %v1380 = vsel %vm500, %v1344, 0.0
        %1381 = vadd.xlane.f32.xlu0 %v1380
        %v1382 = vpop.xlane.xlu0 %1381
        %v1383 = vsel %vm500, %v1346, 0.0
        %1384 = vadd.xlane.f32.xlu0 %v1383
        %v1385 = vpop.xlane.xlu0 %1384
        %v1386 = vsel %vm500, %v1348, 0.0
        %1387 = vadd.xlane.f32.xlu0 %v1386
        %v1388 = vpop.xlane.xlu0 %1387
        %v1389 = vsel %vm500, %v1350, 0.0
        %1390 = vadd.xlane.f32.xlu0 %v1389
        %v1391 = vpop.xlane.xlu0 %1390
        %v1392 = vsel %vm500, %v1352, 0.0
        %1393 = vadd.xlane.f32.xlu0 %v1392
        %v1394 = vpop.xlane.xlu0 %1393
        %v1395 = vsel %vm500, %v1354, 0.0
        %1396 = vadd.xlane.f32.xlu0 %v1395
        %v1397 = vpop.xlane.xlu0 %1396
        %v1398 = vsel %vm500, %v1356, 0.0
        %1399 = vadd.xlane.f32.xlu0 %v1398
        %v1400 = vpop.xlane.xlu0 %1399
        %v1401 = vsel %vm500, %v1358, 0.0
        %1402 = vadd.xlane.f32.xlu0 %v1401
        %v1403 = vpop.xlane.xlu0 %1402
        %v1404 = vsel %vm500, %v1360, 0.0
        %1405 = vadd.xlane.f32.xlu0 %v1404
        %v1406 = vpop.xlane.xlu0 %1405
        %v1407 = vsel %vm500, %v1362, 0.0
        %1408 = vadd.xlane.f32.xlu0 %v1407
        %v1409 = vpop.xlane.xlu0 %1408
        %v1410 = vsel %vm500, %v1364, 0.0
        %1411 = vadd.xlane.f32.xlu0 %v1410
        %v1412 = vpop.xlane.xlu0 %1411
        %v1413 = vrcp.pop %v1367
        %v1414 = vrcp.pop %v1370
        %v1415 = vrcp.pop %v1373
        %v1416 = vrcp.pop %v1376
        %v1417 = vrcp.pop %v1379
        %v1418 = vrcp.pop %v1382
        %v1419 = vrcp.pop %v1385
        %v1420 = vrcp.pop %v1388
        %v1421 = vrcp.pop %v1391
        %v1422 = vrcp.pop %v1394
        %v1423 = vrcp.pop %v1397
        %v1424 = vrcp.pop %v1400
        %v1425 = vrcp.pop %v1403
        %v1426 = vrcp.pop %v1406
        %v1427 = vrcp.pop %v1409
        %v1428 = vrcp.pop %v1412
        %v1429 = vmul.f32 %v1334, %v1413
        %v1430 = vmul.f32 %v1336, %v1414
        %v1431 = vmul.f32 %v1338, %v1415
        %v1432 = vmul.f32 %v1340, %v1416
        %v1433 = vmul.f32 %v1342, %v1417
        %v1434 = vmul.f32 %v1344, %v1418
        %v1435 = vmul.f32 %v1346, %v1419
        %v1436 = vmul.f32 %v1348, %v1420
        %v1437 = vmul.f32 %v1350, %v1421
        %v1438 = vmul.f32 %v1352, %v1422
        %v1439 = vmul.f32 %v1354, %v1423
        %v1440 = vmul.f32 %v1356, %v1424
        %v1441 = vmul.f32 %v1358, %v1425
        %v1442 = vmul.f32 %v1360, %v1426
        %v1443 = vmul.f32 %v1362, %v1427
        %v1444 = vmul.f32 %v1364, %v1428
        %v1445 = vpack.c.bf16 %v1429, %v1429
        %v1446 = vpack.c.bf16 %v1430, %v1430
        %v1447 = vpack.c.bf16 %v1431, %v1431
        %v1448 = vpack.c.bf16 %v1432, %v1432
        %v1449 = vpack.c.bf16 %v1433, %v1433
        %v1450 = vpack.c.bf16 %v1434, %v1434
        %v1451 = vpack.c.bf16 %v1435, %v1435
        %v1452 = vpack.c.bf16 %v1436, %v1436
        %v1453 = vpack.c.bf16 %v1437, %v1437
        %v1454 = vpack.c.bf16 %v1438, %v1438
        %v1455 = vpack.c.bf16 %v1439, %v1439
        %v1456 = vpack.c.bf16 %v1440, %v1440
        %v1457 = vpack.c.bf16 %v1441, %v1441
        %v1458 = vpack.c.bf16 %v1442, %v1442
        %v1459 = vpack.c.bf16 %v1443, %v1443
        %v1460 = vpack.c.bf16 %v1444, %v1444
        %v1461 = vpack.c.bf16 %v415, %v415
        %v1462 = vpack.c.bf16 %v417, %v417
        %v1463 = vpack.c.bf16 %v419, %v419
        %v1464 = vpack.c.bf16 %v421, %v421
        %v1465 = vpack.c.bf16 %v427, %v427
        %v1466 = vpack.c.bf16 %v429, %v429
        %v1467 = vpack.c.bf16 %v431, %v431
        %v1468 = vpack.c.bf16 %v433, %v433
        %v1469 = vpack.c.bf16 %v439, %v439
        %v1470 = vpack.c.bf16 %v441, %v441
        %v1471 = vpack.c.bf16 %v443, %v443
        %v1472 = vpack.c.bf16 %v445, %v445
        %v1473 = vpack.c.bf16 %v451, %v451
        %v1474 = vpack.c.bf16 %v453, %v453
        %v1475 = vpack.c.bf16 %v455, %v455
        %v1476 = vpack.c.bf16 %v457, %v457
        %v1478 = vsel %vm500, %v1445, 0
        %vm1480 = vcmask 1043456
        %v1482 = vsel %vm1480, %v1461, 0
        %1484 = vmatprep.subr.bf16.mxu0 0
        %1485 = vmatpush1.bf16.msra.mxu0 0
        %1486 = vmatprep.subr.bf16.mxu0 0
        %1487 = vmatpush1.bf16.msra.mxu0 0
        %1488 = vmatprep.subr.bf16.mxu0 0
        %1489 = vmatpush1.bf16.msra.mxu0 0
        %1490 = vmatprep.subr.bf16.mxu0 0
        %1491 = vmatpush1.bf16.msra.mxu0 0
        %1492 = vmatprep.subr.bf16.mxu0 0
        %1493 = vmatpush1.bf16.msra.mxu0 0
        %1494 = vmatprep.subr.bf16.mxu0 0
        %1495 = vmatpush1.bf16.msra.mxu0 0
        %1496 = vmatprep.subr.bf16.mxu0 0
        %1497 = vmatpush1.bf16.msra.mxu0 0
        %1498 = vmatprep.subr.bf16.mxu0 0
        %1499 = vmatpush1.bf16.msra.mxu0 %v1482
        %1500 = vmatprep.subr.bf16.mxu0 0
        %1501 = vmatpush2.bf16.msra.mxu0 0
        %1502 = vmatprep.subr.bf16.mxu0 0
        %1503 = vmatpush2.bf16.msra.mxu0 0
        %1504 = vmatprep.subr.bf16.mxu0 0
        %1505 = vmatpush2.bf16.msra.mxu0 0
        %1506 = vmatprep.subr.bf16.mxu0 0
        %1507 = vmatpush2.bf16.msra.mxu0 0
        %1508 = vmatprep.subr.bf16.mxu0 0
        %1509 = vmatpush2.bf16.msra.mxu0 0
        %1510 = vmatprep.subr.bf16.mxu0 0
        %1511 = vmatpush2.bf16.msra.mxu0 0
        %1512 = vmatprep.subr.bf16.mxu0 0
        %1513 = vmatpush2.bf16.msra.mxu0 0
        %1514 = vmatprep.subr.bf16.mxu0 0
        %1515 = vmatpush2.bf16.msra.mxu0 0
        %1516 = vmatprep.mubr.bf16.mxu0 0
        %1517 = vmatmul.mubr.bf16.gmra.mxu0 %v1478
        %v1518 = vpop.f32.mrf.mxu0
        %v1519 = vadd.f32 0.0, %v1518
        %v1520 = vpop.f32.mrf.mxu0
        %v1521 = vpop.f32.mrf.mxu0
        %v1522 = vpop.f32.mrf.mxu0
        %1523 = vdwg.mxu0
        %v1525 = vsel %vm500, %v1446, 0
        %v1528 = vsel %vm1480, %v1462, 0
        %1530 = vmatprep.subr.bf16.mxu0 0
        %1531 = vmatpush1.bf16.msra.mxu0 0
        %1532 = vmatprep.subr.bf16.mxu0 0
        %1533 = vmatpush1.bf16.msra.mxu0 0
        %1534 = vmatprep.subr.bf16.mxu0 0
        %1535 = vmatpush1.bf16.msra.mxu0 0
        %1536 = vmatprep.subr.bf16.mxu0 0
        %1537 = vmatpush1.bf16.msra.mxu0 0
        %1538 = vmatprep.subr.bf16.mxu0 0
        %1539 = vmatpush1.bf16.msra.mxu0 0
        %1540 = vmatprep.subr.bf16.mxu0 0
        %1541 = vmatpush1.bf16.msra.mxu0 0
        %1542 = vmatprep.subr.bf16.mxu0 0
        %1543 = vmatpush1.bf16.msra.mxu0 0
        %1544 = vmatprep.subr.bf16.mxu0 0
        %1545 = vmatpush1.bf16.msra.mxu0 %v1528
        %1546 = vmatprep.subr.bf16.mxu0 0
        %1547 = vmatpush2.bf16.msra.mxu0 0
        %1548 = vmatprep.subr.bf16.mxu0 0
        %1549 = vmatpush2.bf16.msra.mxu0 0
        %1550 = vmatprep.subr.bf16.mxu0 0
        %1551 = vmatpush2.bf16.msra.mxu0 0
        %1552 = vmatprep.subr.bf16.mxu0 0
        %1553 = vmatpush2.bf16.msra.mxu0 0
        %1554 = vmatprep.subr.bf16.mxu0 0
        %1555 = vmatpush2.bf16.msra.mxu0 0
        %1556 = vmatprep.subr.bf16.mxu0 0
        %1557 = vmatpush2.bf16.msra.mxu0 0
        %1558 = vmatprep.subr.bf16.mxu0 0
        %1559 = vmatpush2.bf16.msra.mxu0 0
        %1560 = vmatprep.subr.bf16.mxu0 0
        %1561 = vmatpush2.bf16.msra.mxu0 0
        %1562 = vmatprep.mubr.bf16.mxu0 0
        %1563 = vmatmul.mubr.bf16.gmra.mxu0 %v1525
        %v1564 = vpop.f32.mrf.mxu0
        %v1565 = vadd.f32 0.0, %v1564
        %v1566 = vpop.f32.mrf.mxu0
        %v1567 = vpop.f32.mrf.mxu0
        %v1568 = vpop.f32.mrf.mxu0
        %1569 = vdwg.mxu0
        %v1571 = vsel %vm500, %v1447, 0
        %v1574 = vsel %vm1480, %v1463, 0
        %1576 = vmatprep.subr.bf16.mxu0 0
        %1577 = vmatpush1.bf16.msra.mxu0 0
        %1578 = vmatprep.subr.bf16.mxu0 0
        %1579 = vmatpush1.bf16.msra.mxu0 0
        %1580 = vmatprep.subr.bf16.mxu0 0
        %1581 = vmatpush1.bf16.msra.mxu0 0
        %1582 = vmatprep.subr.bf16.mxu0 0
        %1583 = vmatpush1.bf16.msra.mxu0 0
        %1584 = vmatprep.subr.bf16.mxu0 0
        %1585 = vmatpush1.bf16.msra.mxu0 0
        %1586 = vmatprep.subr.bf16.mxu0 0
        %1587 = vmatpush1.bf16.msra.mxu0 0
        %1588 = vmatprep.subr.bf16.mxu0 0
        %1589 = vmatpush1.bf16.msra.mxu0 0
        %1590 = vmatprep.subr.bf16.mxu0 0
        %1591 = vmatpush1.bf16.msra.mxu0 %v1574
        %1592 = vmatprep.subr.bf16.mxu0 0
        %1593 = vmatpush2.bf16.msra.mxu0 0
        %1594 = vmatprep.subr.bf16.mxu0 0
        %1595 = vmatpush2.bf16.msra.mxu0 0
        %1596 = vmatprep.subr.bf16.mxu0 0
        %1597 = vmatpush2.bf16.msra.mxu0 0
        %1598 = vmatprep.subr.bf16.mxu0 0
        %1599 = vmatpush2.bf16.msra.mxu0 0
        %1600 = vmatprep.subr.bf16.mxu0 0
        %1601 = vmatpush2.bf16.msra.mxu0 0
        %1602 = vmatprep.subr.bf16.mxu0 0
        %1603 = vmatpush2.bf16.msra.mxu0 0
        %1604 = vmatprep.subr.bf16.mxu0 0
        %1605 = vmatpush2.bf16.msra.mxu0 0
        %1606 = vmatprep.subr.bf16.mxu0 0
        %1607 = vmatpush2.bf16.msra.mxu0 0
        %1608 = vmatprep.mubr.bf16.mxu0 0
        %1609 = vmatmul.mubr.bf16.gmra.mxu0 %v1571
        %v1610 = vpop.f32.mrf.mxu0
        %v1611 = vadd.f32 0.0, %v1610
        %v1612 = vpop.f32.mrf.mxu0
        %v1613 = vpop.f32.mrf.mxu0
        %v1614 = vpop.f32.mrf.mxu0
        %1615 = vdwg.mxu0
        %v1617 = vsel %vm500, %v1448, 0
        %v1620 = vsel %vm1480, %v1464, 0
        %1622 = vmatprep.subr.bf16.mxu0 0
        %1623 = vmatpush1.bf16.msra.mxu0 0
        %1624 = vmatprep.subr.bf16.mxu0 0
        %1625 = vmatpush1.bf16.msra.mxu0 0
        %1626 = vmatprep.subr.bf16.mxu0 0
        %1627 = vmatpush1.bf16.msra.mxu0 0
        %1628 = vmatprep.subr.bf16.mxu0 0
        %1629 = vmatpush1.bf16.msra.mxu0 0
        %1630 = vmatprep.subr.bf16.mxu0 0
        %1631 = vmatpush1.bf16.msra.mxu0 0
        %1632 = vmatprep.subr.bf16.mxu0 0
        %1633 = vmatpush1.bf16.msra.mxu0 0
        %1634 = vmatprep.subr.bf16.mxu0 0
        %1635 = vmatpush1.bf16.msra.mxu0 0
        %1636 = vmatprep.subr.bf16.mxu0 0
        %1637 = vmatpush1.bf16.msra.mxu0 %v1620
        %1638 = vmatprep.subr.bf16.mxu0 0
        %1639 = vmatpush2.bf16.msra.mxu0 0
        %1640 = vmatprep.subr.bf16.mxu0 0
        %1641 = vmatpush2.bf16.msra.mxu0 0
        %1642 = vmatprep.subr.bf16.mxu0 0
        %1643 = vmatpush2.bf16.msra.mxu0 0
        %1644 = vmatprep.subr.bf16.mxu0 0
        %1645 = vmatpush2.bf16.msra.mxu0 0
        %1646 = vmatprep.subr.bf16.mxu0 0
        %1647 = vmatpush2.bf16.msra.mxu0 0
        %1648 = vmatprep.subr.bf16.mxu0 0
        %1649 = vmatpush2.bf16.msra.mxu0 0
        %1650 = vmatprep.subr.bf16.mxu0 0
        %1651 = vmatpush2.bf16.msra.mxu0 0
        %1652 = vmatprep.subr.bf16.mxu0 0
        %1653 = vmatpush2.bf16.msra.mxu0 0
        %1654 = vmatprep.mubr.bf16.mxu0 0
        %1655 = vmatmul.mubr.bf16.gmra.mxu0 %v1617
        %v1656 = vpop.f32.mrf.mxu0
        %v1657 = vadd.f32 0.0, %v1656
        %v1658 = vpop.f32.mrf.mxu0
        %v1659 = vpop.f32.mrf.mxu0
        %v1660 = vpop.f32.mrf.mxu0
        %1661 = vdwg.mxu0
        %v1663 = vsel %vm500, %v1449, 0
        %v1666 = vsel %vm1480, %v1465, 0
        %1668 = vmatprep.subr.bf16.mxu0 0
        %1669 = vmatpush1.bf16.msra.mxu0 0
        %1670 = vmatprep.subr.bf16.mxu0 0
        %1671 = vmatpush1.bf16.msra.mxu0 0
        %1672 = vmatprep.subr.bf16.mxu0 0
        %1673 = vmatpush1.bf16.msra.mxu0 0
        %1674 = vmatprep.subr.bf16.mxu0 0
        %1675 = vmatpush1.bf16.msra.mxu0 0
        %1676 = vmatprep.subr.bf16.mxu0 0
        %1677 = vmatpush1.bf16.msra.mxu0 0
        %1678 = vmatprep.subr.bf16.mxu0 0
        %1679 = vmatpush1.bf16.msra.mxu0 0
        %1680 = vmatprep.subr.bf16.mxu0 0
        %1681 = vmatpush1.bf16.msra.mxu0 0
        %1682 = vmatprep.subr.bf16.mxu0 0
        %1683 = vmatpush1.bf16.msra.mxu0 %v1666
        %1684 = vmatprep.subr.bf16.mxu0 0
        %1685 = vmatpush2.bf16.msra.mxu0 0
        %1686 = vmatprep.subr.bf16.mxu0 0
        %1687 = vmatpush2.bf16.msra.mxu0 0
        %1688 = vmatprep.subr.bf16.mxu0 0
        %1689 = vmatpush2.bf16.msra.mxu0 0
        %1690 = vmatprep.subr.bf16.mxu0 0
        %1691 = vmatpush2.bf16.msra.mxu0 0
        %1692 = vmatprep.subr.bf16.mxu0 0
        %1693 = vmatpush2.bf16.msra.mxu0 0
        %1694 = vmatprep.subr.bf16.mxu0 0
        %1695 = vmatpush2.bf16.msra.mxu0 0
        %1696 = vmatprep.subr.bf16.mxu0 0
        %1697 = vmatpush2.bf16.msra.mxu0 0
        %1698 = vmatprep.subr.bf16.mxu0 0
        %1699 = vmatpush2.bf16.msra.mxu0 0
        %1700 = vmatprep.mubr.bf16.mxu0 0
        %1701 = vmatmul.mubr.bf16.gmra.mxu0 %v1663
        %v1702 = vpop.f32.mrf.mxu0
        %v1703 = vadd.f32 0.0, %v1702
        %v1704 = vpop.f32.mrf.mxu0
        %v1705 = vpop.f32.mrf.mxu0
        %v1706 = vpop.f32.mrf.mxu0
        %1707 = vdwg.mxu0
        %v1709 = vsel %vm500, %v1450, 0
        %v1712 = vsel %vm1480, %v1466, 0
        %1714 = vmatprep.subr.bf16.mxu0 0
        %1715 = vmatpush1.bf16.msra.mxu0 0
        %1716 = vmatprep.subr.bf16.mxu0 0
        %1717 = vmatpush1.bf16.msra.mxu0 0
        %1718 = vmatprep.subr.bf16.mxu0 0
        %1719 = vmatpush1.bf16.msra.mxu0 0
        %1720 = vmatprep.subr.bf16.mxu0 0
        %1721 = vmatpush1.bf16.msra.mxu0 0
        %1722 = vmatprep.subr.bf16.mxu0 0
        %1723 = vmatpush1.bf16.msra.mxu0 0
        %1724 = vmatprep.subr.bf16.mxu0 0
        %1725 = vmatpush1.bf16.msra.mxu0 0
        %1726 = vmatprep.subr.bf16.mxu0 0
        %1727 = vmatpush1.bf16.msra.mxu0 0
        %1728 = vmatprep.subr.bf16.mxu0 0
        %1729 = vmatpush1.bf16.msra.mxu0 %v1712
        %1730 = vmatprep.subr.bf16.mxu0 0
        %1731 = vmatpush2.bf16.msra.mxu0 0
        %1732 = vmatprep.subr.bf16.mxu0 0
        %1733 = vmatpush2.bf16.msra.mxu0 0
        %1734 = vmatprep.subr.bf16.mxu0 0
        %1735 = vmatpush2.bf16.msra.mxu0 0
        %1736 = vmatprep.subr.bf16.mxu0 0
        %1737 = vmatpush2.bf16.msra.mxu0 0
        %1738 = vmatprep.subr.bf16.mxu0 0
        %1739 = vmatpush2.bf16.msra.mxu0 0
        %1740 = vmatprep.subr.bf16.mxu0 0
        %1741 = vmatpush2.bf16.msra.mxu0 0
        %1742 = vmatprep.subr.bf16.mxu0 0
        %1743 = vmatpush2.bf16.msra.mxu0 0
        %1744 = vmatprep.subr.bf16.mxu0 0
        %1745 = vmatpush2.bf16.msra.mxu0 0
        %1746 = vmatprep.mubr.bf16.mxu0 0
        %1747 = vmatmul.mubr.bf16.gmra.mxu0 %v1709
        %v1748 = vpop.f32.mrf.mxu0
        %v1749 = vadd.f32 0.0, %v1748
        %v1750 = vpop.f32.mrf.mxu0
        %v1751 = vpop.f32.mrf.mxu0
        %v1752 = vpop.f32.mrf.mxu0
        %1753 = vdwg.mxu0
        %v1755 = vsel %vm500, %v1451, 0
        %v1758 = vsel %vm1480, %v1467, 0
        %1760 = vmatprep.subr.bf16.mxu0 0
        %1761 = vmatpush1.bf16.msra.mxu0 0
        %1762 = vmatprep.subr.bf16.mxu0 0
        %1763 = vmatpush1.bf16.msra.mxu0 0
        %1764 = vmatprep.subr.bf16.mxu0 0
        %1765 = vmatpush1.bf16.msra.mxu0 0
        %1766 = vmatprep.subr.bf16.mxu0 0
        %1767 = vmatpush1.bf16.msra.mxu0 0
        %1768 = vmatprep.subr.bf16.mxu0 0
        %1769 = vmatpush1.bf16.msra.mxu0 0
        %1770 = vmatprep.subr.bf16.mxu0 0
        %1771 = vmatpush1.bf16.msra.mxu0 0
        %1772 = vmatprep.subr.bf16.mxu0 0
        %1773 = vmatpush1.bf16.msra.mxu0 0
        %1774 = vmatprep.subr.bf16.mxu0 0
        %1775 = vmatpush1.bf16.msra.mxu0 %v1758
        %1776 = vmatprep.subr.bf16.mxu0 0
        %1777 = vmatpush2.bf16.msra.mxu0 0
        %1778 = vmatprep.subr.bf16.mxu0 0
        %1779 = vmatpush2.bf16.msra.mxu0 0
        %1780 = vmatprep.subr.bf16.mxu0 0
        %1781 = vmatpush2.bf16.msra.mxu0 0
        %1782 = vmatprep.subr.bf16.mxu0 0
        %1783 = vmatpush2.bf16.msra.mxu0 0
        %1784 = vmatprep.subr.bf16.mxu0 0
        %1785 = vmatpush2.bf16.msra.mxu0 0
        %1786 = vmatprep.subr.bf16.mxu0 0
        %1787 = vmatpush2.bf16.msra.mxu0 0
        %1788 = vmatprep.subr.bf16.mxu0 0
        %1789 = vmatpush2.bf16.msra.mxu0 0
        %1790 = vmatprep.subr.bf16.mxu0 0
        %1791 = vmatpush2.bf16.msra.mxu0 0
        %1792 = vmatprep.mubr.bf16.mxu0 0
        %1793 = vmatmul.mubr.bf16.gmra.mxu0 %v1755
        %v1794 = vpop.f32.mrf.mxu0
        %v1795 = vadd.f32 0.0, %v1794
        %v1796 = vpop.f32.mrf.mxu0
        %v1797 = vpop.f32.mrf.mxu0
        %v1798 = vpop.f32.mrf.mxu0
        %1799 = vdwg.mxu0
        %v1801 = vsel %vm500, %v1452, 0
        %v1804 = vsel %vm1480, %v1468, 0
        %1806 = vmatprep.subr.bf16.mxu0 0
        %1807 = vmatpush1.bf16.msra.mxu0 0
        %1808 = vmatprep.subr.bf16.mxu0 0
        %1809 = vmatpush1.bf16.msra.mxu0 0
        %1810 = vmatprep.subr.bf16.mxu0 0
        %1811 = vmatpush1.bf16.msra.mxu0 0
        %1812 = vmatprep.subr.bf16.mxu0 0
        %1813 = vmatpush1.bf16.msra.mxu0 0
        %1814 = vmatprep.subr.bf16.mxu0 0
        %1815 = vmatpush1.bf16.msra.mxu0 0
        %1816 = vmatprep.subr.bf16.mxu0 0
        %1817 = vmatpush1.bf16.msra.mxu0 0
        %1818 = vmatprep.subr.bf16.mxu0 0
        %1819 = vmatpush1.bf16.msra.mxu0 0
        %1820 = vmatprep.subr.bf16.mxu0 0
        %1821 = vmatpush1.bf16.msra.mxu0 %v1804
        %1822 = vmatprep.subr.bf16.mxu0 0
        %1823 = vmatpush2.bf16.msra.mxu0 0
        %1824 = vmatprep.subr.bf16.mxu0 0
        %1825 = vmatpush2.bf16.msra.mxu0 0
        %1826 = vmatprep.subr.bf16.mxu0 0
        %1827 = vmatpush2.bf16.msra.mxu0 0
        %1828 = vmatprep.subr.bf16.mxu0 0
        %1829 = vmatpush2.bf16.msra.mxu0 0
        %1830 = vmatprep.subr.bf16.mxu0 0
        %1831 = vmatpush2.bf16.msra.mxu0 0
        %1832 = vmatprep.subr.bf16.mxu0 0
        %1833 = vmatpush2.bf16.msra.mxu0 0
        %1834 = vmatprep.subr.bf16.mxu0 0
        %1835 = vmatpush2.bf16.msra.mxu0 0
        %1836 = vmatprep.subr.bf16.mxu0 0
        %1837 = vmatpush2.bf16.msra.mxu0 0
        %1838 = vmatprep.mubr.bf16.mxu0 0
        %1839 = vmatmul.mubr.bf16.gmra.mxu0 %v1801
        %v1840 = vpop.f32.mrf.mxu0
        %v1841 = vadd.f32 0.0, %v1840
        %v1842 = vpop.f32.mrf.mxu0
        %v1843 = vpop.f32.mrf.mxu0
        %v1844 = vpop.f32.mrf.mxu0
        %1845 = vdwg.mxu0
        %v1847 = vsel %vm500, %v1453, 0
        %v1850 = vsel %vm1480, %v1469, 0
        %1852 = vmatprep.subr.bf16.mxu0 0
        %1853 = vmatpush1.bf16.msra.mxu0 0
        %1854 = vmatprep.subr.bf16.mxu0 0
        %1855 = vmatpush1.bf16.msra.mxu0 0
        %1856 = vmatprep.subr.bf16.mxu0 0
        %1857 = vmatpush1.bf16.msra.mxu0 0
        %1858 = vmatprep.subr.bf16.mxu0 0
        %1859 = vmatpush1.bf16.msra.mxu0 0
        %1860 = vmatprep.subr.bf16.mxu0 0
        %1861 = vmatpush1.bf16.msra.mxu0 0
        %1862 = vmatprep.subr.bf16.mxu0 0
        %1863 = vmatpush1.bf16.msra.mxu0 0
        %1864 = vmatprep.subr.bf16.mxu0 0
        %1865 = vmatpush1.bf16.msra.mxu0 0
        %1866 = vmatprep.subr.bf16.mxu0 0
        %1867 = vmatpush1.bf16.msra.mxu0 %v1850
        %1868 = vmatprep.subr.bf16.mxu0 0
        %1869 = vmatpush2.bf16.msra.mxu0 0
        %1870 = vmatprep.subr.bf16.mxu0 0
        %1871 = vmatpush2.bf16.msra.mxu0 0
        %1872 = vmatprep.subr.bf16.mxu0 0
        %1873 = vmatpush2.bf16.msra.mxu0 0
        %1874 = vmatprep.subr.bf16.mxu0 0
        %1875 = vmatpush2.bf16.msra.mxu0 0
        %1876 = vmatprep.subr.bf16.mxu0 0
        %1877 = vmatpush2.bf16.msra.mxu0 0
        %1878 = vmatprep.subr.bf16.mxu0 0
        %1879 = vmatpush2.bf16.msra.mxu0 0
        %1880 = vmatprep.subr.bf16.mxu0 0
        %1881 = vmatpush2.bf16.msra.mxu0 0
        %1882 = vmatprep.subr.bf16.mxu0 0
        %1883 = vmatpush2.bf16.msra.mxu0 0
        %1884 = vmatprep.mubr.bf16.mxu0 0
        %1885 = vmatmul.mubr.bf16.gmra.mxu0 %v1847
        %v1886 = vpop.f32.mrf.mxu0
        %v1887 = vadd.f32 0.0, %v1886
        %v1888 = vpop.f32.mrf.mxu0
        %v1889 = vpop.f32.mrf.mxu0
        %v1890 = vpop.f32.mrf.mxu0
        %1891 = vdwg.mxu0
        %v1893 = vsel %vm500, %v1454, 0
        %v1896 = vsel %vm1480, %v1470, 0
        %1898 = vmatprep.subr.bf16.mxu0 0
        %1899 = vmatpush1.bf16.msra.mxu0 0
        %1900 = vmatprep.subr.bf16.mxu0 0
        %1901 = vmatpush1.bf16.msra.mxu0 0
        %1902 = vmatprep.subr.bf16.mxu0 0
        %1903 = vmatpush1.bf16.msra.mxu0 0
        %1904 = vmatprep.subr.bf16.mxu0 0
        %1905 = vmatpush1.bf16.msra.mxu0 0
        %1906 = vmatprep.subr.bf16.mxu0 0
        %1907 = vmatpush1.bf16.msra.mxu0 0
        %1908 = vmatprep.subr.bf16.mxu0 0
        %1909 = vmatpush1.bf16.msra.mxu0 0
        %1910 = vmatprep.subr.bf16.mxu0 0
        %1911 = vmatpush1.bf16.msra.mxu0 0
        %1912 = vmatprep.subr.bf16.mxu0 0
        %1913 = vmatpush1.bf16.msra.mxu0 %v1896
        %1914 = vmatprep.subr.bf16.mxu0 0
        %1915 = vmatpush2.bf16.msra.mxu0 0
        %1916 = vmatprep.subr.bf16.mxu0 0
        %1917 = vmatpush2.bf16.msra.mxu0 0
        %1918 = vmatprep.subr.bf16.mxu0 0
        %1919 = vmatpush2.bf16.msra.mxu0 0
        %1920 = vmatprep.subr.bf16.mxu0 0
        %1921 = vmatpush2.bf16.msra.mxu0 0
        %1922 = vmatprep.subr.bf16.mxu0 0
        %1923 = vmatpush2.bf16.msra.mxu0 0
        %1924 = vmatprep.subr.bf16.mxu0 0
        %1925 = vmatpush2.bf16.msra.mxu0 0
        %1926 = vmatprep.subr.bf16.mxu0 0
        %1927 = vmatpush2.bf16.msra.mxu0 0
        %1928 = vmatprep.subr.bf16.mxu0 0
        %1929 = vmatpush2.bf16.msra.mxu0 0
        %1930 = vmatprep.mubr.bf16.mxu0 0
        %1931 = vmatmul.mubr.bf16.gmra.mxu0 %v1893
        %v1932 = vpop.f32.mrf.mxu0
        %v1933 = vadd.f32 0.0, %v1932
        %v1934 = vpop.f32.mrf.mxu0
        %v1935 = vpop.f32.mrf.mxu0
        %v1936 = vpop.f32.mrf.mxu0
        %1937 = vdwg.mxu0
        %v1939 = vsel %vm500, %v1455, 0
        %v1942 = vsel %vm1480, %v1471, 0
        %1944 = vmatprep.subr.bf16.mxu0 0
        %1945 = vmatpush1.bf16.msra.mxu0 0
        %1946 = vmatprep.subr.bf16.mxu0 0
        %1947 = vmatpush1.bf16.msra.mxu0 0
        %1948 = vmatprep.subr.bf16.mxu0 0
        %1949 = vmatpush1.bf16.msra.mxu0 0
        %1950 = vmatprep.subr.bf16.mxu0 0
        %1951 = vmatpush1.bf16.msra.mxu0 0
        %1952 = vmatprep.subr.bf16.mxu0 0
        %1953 = vmatpush1.bf16.msra.mxu0 0
        %1954 = vmatprep.subr.bf16.mxu0 0
        %1955 = vmatpush1.bf16.msra.mxu0 0
        %1956 = vmatprep.subr.bf16.mxu0 0
        %1957 = vmatpush1.bf16.msra.mxu0 0
        %1958 = vmatprep.subr.bf16.mxu0 0
        %1959 = vmatpush1.bf16.msra.mxu0 %v1942
        %1960 = vmatprep.subr.bf16.mxu0 0
        %1961 = vmatpush2.bf16.msra.mxu0 0
        %1962 = vmatprep.subr.bf16.mxu0 0
        %1963 = vmatpush2.bf16.msra.mxu0 0
        %1964 = vmatprep.subr.bf16.mxu0 0
        %1965 = vmatpush2.bf16.msra.mxu0 0
        %1966 = vmatprep.subr.bf16.mxu0 0
        %1967 = vmatpush2.bf16.msra.mxu0 0
        %1968 = vmatprep.subr.bf16.mxu0 0
        %1969 = vmatpush2.bf16.msra.mxu0 0
        %1970 = vmatprep.subr.bf16.mxu0 0
        %1971 = vmatpush2.bf16.msra.mxu0 0
        %1972 = vmatprep.subr.bf16.mxu0 0
        %1973 = vmatpush2.bf16.msra.mxu0 0
        %1974 = vmatprep.subr.bf16.mxu0 0
        %1975 = vmatpush2.bf16.msra.mxu0 0
        %1976 = vmatprep.mubr.bf16.mxu0 0
        %1977 = vmatmul.mubr.bf16.gmra.mxu0 %v1939
        %v1978 = vpop.f32.mrf.mxu0
        %v1979 = vadd.f32 0.0, %v1978
        %v1980 = vpop.f32.mrf.mxu0
        %v1981 = vpop.f32.mrf.mxu0
        %v1982 = vpop.f32.mrf.mxu0
        %1983 = vdwg.mxu0
        %v1985 = vsel %vm500, %v1456, 0
        %v1988 = vsel %vm1480, %v1472, 0
        %1990 = vmatprep.subr.bf16.mxu0 0
        %1991 = vmatpush1.bf16.msra.mxu0 0
        %1992 = vmatprep.subr.bf16.mxu0 0
        %1993 = vmatpush1.bf16.msra.mxu0 0
        %1994 = vmatprep.subr.bf16.mxu0 0
        %1995 = vmatpush1.bf16.msra.mxu0 0
        %1996 = vmatprep.subr.bf16.mxu0 0
        %1997 = vmatpush1.bf16.msra.mxu0 0
        %1998 = vmatprep.subr.bf16.mxu0 0
        %1999 = vmatpush1.bf16.msra.mxu0 0
        %2000 = vmatprep.subr.bf16.mxu0 0
        %2001 = vmatpush1.bf16.msra.mxu0 0
        %2002 = vmatprep.subr.bf16.mxu0 0
        %2003 = vmatpush1.bf16.msra.mxu0 0
        %2004 = vmatprep.subr.bf16.mxu0 0
        %2005 = vmatpush1.bf16.msra.mxu0 %v1988
        %2006 = vmatprep.subr.bf16.mxu0 0
        %2007 = vmatpush2.bf16.msra.mxu0 0
        %2008 = vmatprep.subr.bf16.mxu0 0
        %2009 = vmatpush2.bf16.msra.mxu0 0
        %2010 = vmatprep.subr.bf16.mxu0 0
        %2011 = vmatpush2.bf16.msra.mxu0 0
        %2012 = vmatprep.subr.bf16.mxu0 0
        %2013 = vmatpush2.bf16.msra.mxu0 0
        %2014 = vmatprep.subr.bf16.mxu0 0
        %2015 = vmatpush2.bf16.msra.mxu0 0
        %2016 = vmatprep.subr.bf16.mxu0 0
        %2017 = vmatpush2.bf16.msra.mxu0 0
        %2018 = vmatprep.subr.bf16.mxu0 0
        %2019 = vmatpush2.bf16.msra.mxu0 0
        %2020 = vmatprep.subr.bf16.mxu0 0
        %2021 = vmatpush2.bf16.msra.mxu0 0
        %2022 = vmatprep.mubr.bf16.mxu0 0
        %2023 = vmatmul.mubr.bf16.gmra.mxu0 %v1985
        %v2024 = vpop.f32.mrf.mxu0
        %v2025 = vadd.f32 0.0, %v2024
        %v2026 = vpop.f32.mrf.mxu0
        %v2027 = vpop.f32.mrf.mxu0
        %v2028 = vpop.f32.mrf.mxu0
        %2029 = vdwg.mxu0
        %v2031 = vsel %vm500, %v1457, 0
        %v2034 = vsel %vm1480, %v1473, 0
        %2036 = vmatprep.subr.bf16.mxu0 0
        %2037 = vmatpush1.bf16.msra.mxu0 0
        %2038 = vmatprep.subr.bf16.mxu0 0
        %2039 = vmatpush1.bf16.msra.mxu0 0
        %2040 = vmatprep.subr.bf16.mxu0 0
        %2041 = vmatpush1.bf16.msra.mxu0 0
        %2042 = vmatprep.subr.bf16.mxu0 0
        %2043 = vmatpush1.bf16.msra.mxu0 0
        %2044 = vmatprep.subr.bf16.mxu0 0
        %2045 = vmatpush1.bf16.msra.mxu0 0
        %2046 = vmatprep.subr.bf16.mxu0 0
        %2047 = vmatpush1.bf16.msra.mxu0 0
        %2048 = vmatprep.subr.bf16.mxu0 0
        %2049 = vmatpush1.bf16.msra.mxu0 0
        %2050 = vmatprep.subr.bf16.mxu0 0
        %2051 = vmatpush1.bf16.msra.mxu0 %v2034
        %2052 = vmatprep.subr.bf16.mxu0 0
        %2053 = vmatpush2.bf16.msra.mxu0 0
        %2054 = vmatprep.subr.bf16.mxu0 0
        %2055 = vmatpush2.bf16.msra.mxu0 0
        %2056 = vmatprep.subr.bf16.mxu0 0
        %2057 = vmatpush2.bf16.msra.mxu0 0
        %2058 = vmatprep.subr.bf16.mxu0 0
        %2059 = vmatpush2.bf16.msra.mxu0 0
        %2060 = vmatprep.subr.bf16.mxu0 0
        %2061 = vmatpush2.bf16.msra.mxu0 0
        %2062 = vmatprep.subr.bf16.mxu0 0
        %2063 = vmatpush2.bf16.msra.mxu0 0
        %2064 = vmatprep.subr.bf16.mxu0 0
        %2065 = vmatpush2.bf16.msra.mxu0 0
        %2066 = vmatprep.subr.bf16.mxu0 0
        %2067 = vmatpush2.bf16.msra.mxu0 0
        %2068 = vmatprep.mubr.bf16.mxu0 0
        %2069 = vmatmul.mubr.bf16.gmra.mxu0 %v2031
        %v2070 = vpop.f32.mrf.mxu0
        %v2071 = vadd.f32 0.0, %v2070
        %v2072 = vpop.f32.mrf.mxu0
        %v2073 = vpop.f32.mrf.mxu0
        %v2074 = vpop.f32.mrf.mxu0
        %2075 = vdwg.mxu0
        %v2077 = vsel %vm500, %v1458, 0
        %v2080 = vsel %vm1480, %v1474, 0
        %2082 = vmatprep.subr.bf16.mxu0 0
        %2083 = vmatpush1.bf16.msra.mxu0 0
        %2084 = vmatprep.subr.bf16.mxu0 0
        %2085 = vmatpush1.bf16.msra.mxu0 0
        %2086 = vmatprep.subr.bf16.mxu0 0
        %2087 = vmatpush1.bf16.msra.mxu0 0
        %2088 = vmatprep.subr.bf16.mxu0 0
        %2089 = vmatpush1.bf16.msra.mxu0 0
        %2090 = vmatprep.subr.bf16.mxu0 0
        %2091 = vmatpush1.bf16.msra.mxu0 0
        %2092 = vmatprep.subr.bf16.mxu0 0
        %2093 = vmatpush1.bf16.msra.mxu0 0
        %2094 = vmatprep.subr.bf16.mxu0 0
        %2095 = vmatpush1.bf16.msra.mxu0 0
        %2096 = vmatprep.subr.bf16.mxu0 0
        %2097 = vmatpush1.bf16.msra.mxu0 %v2080
        %2098 = vmatprep.subr.bf16.mxu0 0
        %2099 = vmatpush2.bf16.msra.mxu0 0
        %2100 = vmatprep.subr.bf16.mxu0 0
        %2101 = vmatpush2.bf16.msra.mxu0 0
        %2102 = vmatprep.subr.bf16.mxu0 0
        %2103 = vmatpush2.bf16.msra.mxu0 0
        %2104 = vmatprep.subr.bf16.mxu0 0
        %2105 = vmatpush2.bf16.msra.mxu0 0
        %2106 = vmatprep.subr.bf16.mxu0 0
        %2107 = vmatpush2.bf16.msra.mxu0 0
        %2108 = vmatprep.subr.bf16.mxu0 0
        %2109 = vmatpush2.bf16.msra.mxu0 0
        %2110 = vmatprep.subr.bf16.mxu0 0
        %2111 = vmatpush2.bf16.msra.mxu0 0
        %2112 = vmatprep.subr.bf16.mxu0 0
        %2113 = vmatpush2.bf16.msra.mxu0 0
        %2114 = vmatprep.mubr.bf16.mxu0 0
        %2115 = vmatmul.mubr.bf16.gmra.mxu0 %v2077
        %v2116 = vpop.f32.mrf.mxu0
        %v2117 = vadd.f32 0.0, %v2116
        %v2118 = vpop.f32.mrf.mxu0
        %v2119 = vpop.f32.mrf.mxu0
        %v2120 = vpop.f32.mrf.mxu0
        %2121 = vdwg.mxu0
        %v2123 = vsel %vm500, %v1459, 0
        %v2126 = vsel %vm1480, %v1475, 0
        %2128 = vmatprep.subr.bf16.mxu0 0
        %2129 = vmatpush1.bf16.msra.mxu0 0
        %2130 = vmatprep.subr.bf16.mxu0 0
        %2131 = vmatpush1.bf16.msra.mxu0 0
        %2132 = vmatprep.subr.bf16.mxu0 0
        %2133 = vmatpush1.bf16.msra.mxu0 0
        %2134 = vmatprep.subr.bf16.mxu0 0
        %2135 = vmatpush1.bf16.msra.mxu0 0
        %2136 = vmatprep.subr.bf16.mxu0 0
        %2137 = vmatpush1.bf16.msra.mxu0 0
        %2138 = vmatprep.subr.bf16.mxu0 0
        %2139 = vmatpush1.bf16.msra.mxu0 0
        %2140 = vmatprep.subr.bf16.mxu0 0
        %2141 = vmatpush1.bf16.msra.mxu0 0
        %2142 = vmatprep.subr.bf16.mxu0 0
        %2143 = vmatpush1.bf16.msra.mxu0 %v2126
        %2144 = vmatprep.subr.bf16.mxu0 0
        %2145 = vmatpush2.bf16.msra.mxu0 0
        %2146 = vmatprep.subr.bf16.mxu0 0
        %2147 = vmatpush2.bf16.msra.mxu0 0
        %2148 = vmatprep.subr.bf16.mxu0 0
        %2149 = vmatpush2.bf16.msra.mxu0 0
        %2150 = vmatprep.subr.bf16.mxu0 0
        %2151 = vmatpush2.bf16.msra.mxu0 0
        %2152 = vmatprep.subr.bf16.mxu0 0
        %2153 = vmatpush2.bf16.msra.mxu0 0
        %2154 = vmatprep.subr.bf16.mxu0 0
        %2155 = vmatpush2.bf16.msra.mxu0 0
        %2156 = vmatprep.subr.bf16.mxu0 0
        %2157 = vmatpush2.bf16.msra.mxu0 0
        %2158 = vmatprep.subr.bf16.mxu0 0
        %2159 = vmatpush2.bf16.msra.mxu0 0
        %2160 = vmatprep.mubr.bf16.mxu0 0
        %2161 = vmatmul.mubr.bf16.gmra.mxu0 %v2123
        %v2162 = vpop.f32.mrf.mxu0
        %v2163 = vadd.f32 0.0, %v2162
        %v2164 = vpop.f32.mrf.mxu0
        %v2165 = vpop.f32.mrf.mxu0
        %v2166 = vpop.f32.mrf.mxu0
        %2167 = vdwg.mxu0
        %v2169 = vsel %vm500, %v1460, 0
        %v2172 = vsel %vm1480, %v1476, 0
        %2174 = vmatprep.subr.bf16.mxu0 0
        %2175 = vmatpush1.bf16.msra.mxu0 0
        %2176 = vmatprep.subr.bf16.mxu0 0
        %2177 = vmatpush1.bf16.msra.mxu0 0
        %2178 = vmatprep.subr.bf16.mxu0 0
        %2179 = vmatpush1.bf16.msra.mxu0 0
        %2180 = vmatprep.subr.bf16.mxu0 0
        %2181 = vmatpush1.bf16.msra.mxu0 0
        %2182 = vmatprep.subr.bf16.mxu0 0
        %2183 = vmatpush1.bf16.msra.mxu0 0
        %2184 = vmatprep.subr.bf16.mxu0 0
        %2185 = vmatpush1.bf16.msra.mxu0 0
        %2186 = vmatprep.subr.bf16.mxu0 0
        %2187 = vmatpush1.bf16.msra.mxu0 0
        %2188 = vmatprep.subr.bf16.mxu0 0
        %2189 = vmatpush1.bf16.msra.mxu0 %v2172
        %2190 = vmatprep.subr.bf16.mxu0 0
        %2191 = vmatpush2.bf16.msra.mxu0 0
        %2192 = vmatprep.subr.bf16.mxu0 0
        %2193 = vmatpush2.bf16.msra.mxu0 0
        %2194 = vmatprep.subr.bf16.mxu0 0
        %2195 = vmatpush2.bf16.msra.mxu0 0
        %2196 = vmatprep.subr.bf16.mxu0 0
        %2197 = vmatpush2.bf16.msra.mxu0 0
        %2198 = vmatprep.subr.bf16.mxu0 0
        %2199 = vmatpush2.bf16.msra.mxu0 0
        %2200 = vmatprep.subr.bf16.mxu0 0
        %2201 = vmatpush2.bf16.msra.mxu0 0
        %2202 = vmatprep.subr.bf16.mxu0 0
        %2203 = vmatpush2.bf16.msra.mxu0 0
        %2204 = vmatprep.subr.bf16.mxu0 0
        %2205 = vmatpush2.bf16.msra.mxu0 0
        %2206 = vmatprep.mubr.bf16.mxu0 0
        %2207 = vmatmul.mubr.bf16.gmra.mxu0 %v2169
        %v2208 = vpop.f32.mrf.mxu0
        %v2209 = vadd.f32 0.0, %v2208
        %v2210 = vpop.f32.mrf.mxu0
        %v2211 = vpop.f32.mrf.mxu0
        %v2212 = vpop.f32.mrf.mxu0
        %2213 = vdwg.mxu0
        %2218 = vrot.lane.b32.xlu0 %v1703, 8
        %v2219 = vpop.permute.xlu0 %2218
        %2220 = vrot.lane.b32.xlu0 %v1749, 8
        %v2221 = vpop.permute.xlu0 %2220
        %2222 = vrot.lane.b32.xlu0 %v1795, 8
        %v2223 = vpop.permute.xlu0 %2222
        %2224 = vrot.lane.b32.xlu0 %v1841, 8
        %v2225 = vpop.permute.xlu0 %2224
        %2234 = vrot.lane.b32.xlu0 %v1887, 16
        %v2235 = vpop.permute.xlu0 %2234
        %2236 = vrot.lane.b32.xlu0 %v1933, 16
        %v2237 = vpop.permute.xlu0 %2236
        %2238 = vrot.lane.b32.xlu0 %v1979, 16
        %v2239 = vpop.permute.xlu0 %2238
        %2240 = vrot.lane.b32.xlu0 %v2025, 16
        %v2241 = vpop.permute.xlu0 %2240
        %2250 = vrot.lane.b32.xlu0 %v2071, 24
        %v2251 = vpop.permute.xlu0 %2250
        %2252 = vrot.lane.b32.xlu0 %v2117, 24
        %v2253 = vpop.permute.xlu0 %2252
        %2254 = vrot.lane.b32.xlu0 %v2163, 24
        %v2255 = vpop.permute.xlu0 %2254
        %2256 = vrot.lane.b32.xlu0 %v2209, 24
        %v2257 = vpop.permute.xlu0 %2256
        %v2262 = vsel %vm500, %v1519, %v2219
        %v2263 = vsel %vm500, %v1565, %v2221
        %v2264 = vsel %vm500, %v1611, %v2223
        %v2265 = vsel %vm500, %v1657, %v2225
        %vm2266 = vcmask 130048
        %v2267 = vsel %vm2266, %v2262, %v2235
        %v2268 = vsel %vm2266, %v2263, %v2237
        %v2269 = vsel %vm2266, %v2264, %v2239
        %v2270 = vsel %vm2266, %v2265, %v2241
        %vm2271 = vcmask 195584
        %v2272 = vsel %vm2271, %v2267, %v2251
        %v2273 = vsel %vm2271, %v2268, %v2253
        %v2274 = vsel %vm2271, %v2269, %v2255
        %v2275 = vsel %vm2271, %v2270, %v2257
        %v2276 = vpack.c.bf16 %v2273, %v2272
        %v2277 = vpack.c.bf16 %v2275, %v2274
        %v2278 = vld [vmem:[#allocation7] sm:$0xf]
        %v2279 = vld [vmem:[#allocation7 + $0x4] sm:$0xf]
        %v2280 = vld [vmem:[#allocation7 + $0x8] sm:$0xf]
        %v2281 = vld [vmem:[#allocation7 + $0xc] sm:$0xf]
        %v2282 = vld [vmem:[%s3] sm:$0x1]
        %v2284 = vlaneseq
        %v2285 = vshrl.u32 %v2284, 7
        %v2286 = vsub.s32 0, %v2285
        %v2287 = vrot.slane %v2282, %v2286
        %v2293 = vunpack.c.l.b16 %v2278
        %v2294 = vunpack.c.l.b16 %v2279
        %v2295 = vunpack.c.l.b16 %v2280
        %v2296 = vunpack.c.l.b16 %v2281
        %v2297 = vpack.c.b16 %v2294, %v2293
        %v2298 = vpack.c.b16 %v2296, %v2295
        %v2302 = vsel %vm270, %v2276, 0
        %v2305 = vsel %vm270, %v2277, 0
        %2307 = vmatprep.subr.bf16.mxu0 0
        %2308 = vmatpush1.bf16.msra.mxu0 0
        %2309 = vmatprep.subr.bf16.mxu0 0
        %2310 = vmatpush1.bf16.msra.mxu0 0
        %2311 = vmatprep.subr.bf16.mxu0 0
        %2312 = vmatpush1.bf16.msra.mxu0 0
        %2313 = vmatprep.subr.bf16.mxu0 0
        %2314 = vmatpush1.bf16.msra.mxu0 0
        %2315 = vmatprep.subr.bf16.mxu0 0
        %2316 = vmatpush1.bf16.msra.mxu0 0
        %2317 = vmatprep.subr.bf16.mxu0 0
        %2318 = vmatpush1.bf16.msra.mxu0 0
        %2319 = vmatprep.subr.bf16.mxu0 0
        %2320 = vmatpush1.bf16.msra.mxu0 %v2298
        %2321 = vmatprep.subr.bf16.mxu0 0
        %2322 = vmatpush1.bf16.msra.mxu0 %v2297
        %2323 = vmatprep.subr.bf16.mxu0 0
        %2324 = vmatpush2.bf16.msra.mxu0 0
        %2325 = vmatprep.subr.bf16.mxu0 0
        %2326 = vmatpush2.bf16.msra.mxu0 0
        %2327 = vmatprep.subr.bf16.mxu0 0
        %2328 = vmatpush2.bf16.msra.mxu0 0
        %2329 = vmatprep.subr.bf16.mxu0 0
        %2330 = vmatpush2.bf16.msra.mxu0 0
        %2331 = vmatprep.subr.bf16.mxu0 0
        %2332 = vmatpush2.bf16.msra.mxu0 0
        %2333 = vmatprep.subr.bf16.mxu0 0
        %2334 = vmatpush2.bf16.msra.mxu0 0
        %2335 = vmatprep.subr.bf16.mxu0 0
        %2336 = vmatpush2.bf16.msra.mxu0 0
        %2337 = vmatprep.subr.bf16.mxu0 0
        %2338 = vmatpush2.bf16.msra.mxu0 0
        %2339 = vmatprep.mubr.bf16.mxu0 0
        %2340 = vmatmul.mubr.bf16.gmra.mxu0 %v2302
        %v2341 = vpop.f32.mrf.mxu0
        %v2342 = vadd.f32 %v2287, %v2341
        %v2343 = vpop.f32.mrf.mxu0
        %v2344 = vpop.f32.mrf.mxu0
        %v2345 = vadd.f32 %v2287, %v2344
        %v2346 = vpop.f32.mrf.mxu0
        %2347 = vmatprep.mubr.bf16.mxu0 0
        %2348 = vmatmul.mubr.bf16.gmra.mxu0 %v2305
        %v2349 = vpop.f32.mrf.mxu0
        %v2350 = vadd.f32 %v2287, %v2349
        %v2351 = vpop.f32.mrf.mxu0
        %v2352 = vpop.f32.mrf.mxu0
        %v2353 = vadd.f32 %v2287, %v2352
        %v2354 = vpop.f32.mrf.mxu0
        %2355 = vdwg.mxu0
        %2356 = vst.msk [vmem:[%s244] sm:$0xff] %vm270, %v2342
        %2357 = vst.msk [vmem:[%s244 + $0x8] sm:$0xff] %vm270, %v2345
        %2358 = vst.msk [vmem:[%s244 + $0x10] sm:$0xff] %vm270, %v2350
        %2359 = vst.msk [vmem:[%s244 + $0x18] sm:$0xff] %vm270, %v2353
        %s2360 = sand.u32 %s119, 1
        %s2361 = scalar_lea.sflag [#allocation4], %s2360
        %s2362 = sand.u32 %s119, 1
        %s2363 = smul.addr %s2362, 32
        %s2364 = scalar_lea.vmem [#allocation8], %s2363
        // Predicated region
        $region49: #{tpu_custom_call.1} parent=35 // pred_check
          %p2365 = pneg %p129
        $region50: #{tpu_custom_call.1} parent=35 // pred_check_branch
          %2367 = sbr.rel (%p2365) target = $region52
        $region51: #{tpu_custom_call.1} parent=35 // pred_region
          %s2368 = smul.u32 4, %s22
          %s2370 = ssub.s32 512, 512
          %2371 = vsyncadd %s2361, %s2370
          %s2372 = smul.addr %s2368, 128
          %s2373 = scalar_lea.hbm %s4, %s2372
          %s2374 = sshll.u32 %s2364, 4
          %s2375 = int_to_ptr.vmem [resolvable:$true] %s2374
          %2380 = dma.vmem_to_hbm [thread:$0]  %s2375, 512, %s2373, %s2361, 128, 128, 8
        $region52: #{tpu_custom_call.1} parent=35 // pred_fallthru
          _
      $region36: #{tpu_custom_call.1} parent=5 // pred_fallthru
        _
      %p2381 = scmp.le.s32.totalorder 2, %s17
      // Predicated region
      $region53: #{tpu_custom_call.1} parent=5 // pred_check
        %p2382 = pneg %p2381
      $region54: #{tpu_custom_call.1} parent=5 // pred_check_branch
        %2384 = sbr.rel (%p2382) target = $region56
      $region55: #{tpu_custom_call.1} parent=5 // pred_region
        %s2385 = ssub.s32 %s17, 2
        // Predicated region
        $region57: #{tpu_custom_call.1} parent=55 // pred_check
          %p2386 = pneg %p135
        $region58: #{tpu_custom_call.1} parent=55 // pred_check_branch
          %2388 = sbr.rel (%p2386) target = $region60
        $region59: #{tpu_custom_call.1} parent=55 // pred_region
          %s2389 = sand.u32 %s120, 1
          %s2390 = scalar_lea.sflag [#allocation4], %s2389
          %s2391 = sand.u32 %s120, 1
          %s2392 = smul.addr %s2391, 32
          %s2393 = scalar_lea.vmem [#allocation8], %s2392
          %2394 = dma.done %s2390, 512
        $region60: #{tpu_custom_call.1} parent=55 // pred_fallthru
          _
      $region56: #{tpu_custom_call.1} parent=5 // pred_fallthru
        _
    $region6: #{tpu_custom_call.1} parent=1 // loop_footer
      %s21 = sadd.s32 1, %s17
    $region7: #{tpu_custom_call.1} parent=1 // loop_footer_branch
      %16 = sbr.rel target = $region3
    $region8: #{tpu_custom_call.1} parent=1 // loop_exit
      _
    %2395 = vsyncpa [#allocation3], 1
    %s2396 = scalar_lea.sflag [#allocation3], 1
    %2397 = vsyncpa %s2396, 1
    %2398 = vsyncpa [#allocation6], 1
    %2399 = vsyncpa [#allocation4], 1
    %s2400 = scalar_lea.sflag [#allocation4], 1
    %2401 = vsyncpa %s2400, 1

</llo_original>
